<compile_context>
chip_gen: v7x
topology: tpu7x:2x2x1
jax: 0.10.0
libtpu: 0.0.40
codegen_flags: <defaults>
</compile_context>

<pallas_src>
import jax
import jax.numpy as jnp
from jax.experimental import pallas as pl
from jax.experimental.pallas import tpu as pltpu

LN_EPS = 1e-5
LANE = 128


def _round_up(n, m):
    return ((n + m - 1) // m) * m


def _make_fused_kernel(hidden_units):
    """Whole-network kernel body (layer loop unrolled at trace time)."""

    def kernel(x_ref, *refs):
        o_ref = refs[-1]
        h_mm = x_ref[...]                                # (TB, in_pad) bf16
        r = 0
        for units in hidden_units:
            w = refs[r][...]                             # (in_pad, out_pad) bf16
            aux = refs[r + 1][...]                       # (4, out_pad) f32
            r += 2
            bias, gamma, beta, mask = (aux[0:1, :], aux[1:2, :],
                                       aux[2:3, :], aux[3:4, :])
            # Linear on the MXU: bf16 operands, f32 accumulation.
            acc = jnp.dot(h_mm, w, preferred_element_type=jnp.float32)
            hlin = (acc + bias) * mask                   # padded lanes forced to 0
            # Two-pass LayerNorm over the REAL feature width; the mask keeps padded
            # lanes out of the statistics (reduces run on the XLU, overlap the MXU).
            inv_n = 1.0 / float(units)
            mean = jnp.sum(hlin, axis=-1, keepdims=True) * inv_n
            centered = (hlin - mean) * mask
            var = jnp.sum(centered * centered, axis=-1, keepdims=True) * inv_n
            hn = centered * jax.lax.rsqrt(var + LN_EPS)
            # Affine + ReLU; trailing mask keeps padded lanes exactly 0 regardless
            # of what gamma/beta hold in the padding.
            h = jnp.maximum(hn * gamma + beta, 0.0) * mask
            # TODO(synk): Dropout(0.1) is identity here (eval-mode semantics).
            h_mm = h.astype(jnp.bfloat16)
        w_f = refs[r][...]                               # (in_pad, out_pad) bf16
        b_f = refs[r + 1][...]                           # (1, out_pad) f32
        out = jnp.dot(h_mm, w_f, preferred_element_type=jnp.float32) + b_f
        o_ref[...] = out.astype(o_ref.dtype)

    return kernel


def init_params(key, input_size, output_size, layers_config):
    """PyTorch-style init.

    Returns:
      flat_params: arrays only (jit-friendly) in kernel layout — padded bf16
                   weights and packed (bias, gamma, beta, lane-mask) per hidden
                   layer, plus padded final weight/bias.
      ref_layers / ref_final: unpadded f32 params for the pure-JAX references.
    """
    ref_layers = []
    flat = []
    in_f = input_size
    for units in layers_config:
        key, kw, kb, kg, kbt = jax.random.split(key, 5)
        bound = 1.0 / float(in_f) ** 0.5
        w = jax.random.uniform(kw, (in_f, units), jnp.float32, -bound, bound)
        b = jax.random.uniform(kb, (units,), jnp.float32, -bound, bound)
        gamma = 1.0 + 0.01 * jax.random.normal(kg, (units,), jnp.float32)
        beta = 0.01 * jax.random.normal(kbt, (units,), jnp.float32)
        ref_layers.append((w, b, gamma, beta))

        in_pad = _round_up(in_f, LANE)
        out_pad = _round_up(units, LANE)
        w_pad = jnp.zeros((in_pad, out_pad), jnp.float32).at[:in_f, :units].set(w)
        aux = (jnp.zeros((4, out_pad), jnp.float32)
               .at[0, :units].set(b)
               .at[1, :units].set(gamma)
               .at[2, :units].set(beta)
               .at[3, :units].set(1.0))     # lane mask for the real feature width
        flat.append(w_pad.astype(jnp.bfloat16))
        flat.append(aux)
        in_f = units

    key, kw, kb = jax.random.split(key, 3)
    bound = 1.0 / float(in_f) ** 0.5
    w = jax.random.uniform(kw, (in_f, output_size), jnp.float32, -bound, bound)
    b = jax.random.uniform(kb, (output_size,), jnp.float32, -bound, bound)
    ref_final = (w, b)
    in_pad = _round_up(in_f, LANE)
    out_pad = _round_up(output_size, LANE)
    w_pad = jnp.zeros((in_pad, out_pad), jnp.float32).at[:in_f, :output_size].set(w)
    b_pad = jnp.zeros((1, out_pad), jnp.float32).at[0, :output_size].set(b)
    flat.append(w_pad.astype(jnp.bfloat16))
    flat.append(b_pad)
    return tuple(flat), ref_layers, ref_final


def _param_spec(shape, single_buffer):
    """Resident (grid-invariant) parameter BlockSpec; single-buffered if supported."""
    index_map = lambda b: (0,) * len(shape)
    if single_buffer:
        try:
            return pl.BlockSpec(shape, index_map, pipeline_mode=pl.Buffered(1))
        except Exception:
            pass
    return pl.BlockSpec(shape, index_map)


def _device_defaults():
    """(default batch tile, is_v7x) from the local TPU generation."""
    try:
        kind = jax.devices()[0].device_kind.lower()
    except Exception:
        return 256, False
    if "v5 lite" in kind or "v5e" in kind or "v5lite" in kind:
        return 128, False            # v5e: 4x128^2 MXU
    return 256, ("7" in kind)        # v6e / v7x: 2x256^2 MXU


def make_cpd_forward(input_size, output_size, layers_config, batch_tile=None,
                     single_buffer_params=True):
    """Builds a jitted forward pass (x, flat_params) -> (batch, output_size)."""
    hidden_units = tuple(layers_config)
    in_pad = _round_up(input_size, LANE)
    out_pad = _round_up(output_size, LANE)
    kernel = _make_fused_kernel(hidden_units)

    default_tile, is_v7x = _device_defaults()
    if batch_tile is not None:
        default_tile = int(batch_tile)

    # Parameter BlockSpecs: whole array, same block every grid step -> resident.
    param_specs = []
    param_bytes = 0
    in_f = input_size
    for units in hidden_units:
        wi = _round_up(in_f, LANE)
        wo = _round_up(units, LANE)
        param_specs.append(_param_spec((wi, wo), single_buffer_params))
        param_specs.append(_param_spec((4, wo), single_buffer_params))
        param_bytes += wi * wo * 2 + 4 * wo * 4
        in_f = units
    wi = _round_up(in_f, LANE)
    param_specs.append(_param_spec((wi, out_pad), single_buffer_params))
    param_specs.append(_param_spec((1, out_pad), single_buffer_params))
    param_bytes += wi * out_pad * 2 + out_pad * 4
    max_pad = max([in_pad, out_pad] + [_round_up(u, LANE) for u in hidden_units])

    @jax.jit
    def forward(x, flat_params):
        batch = x.shape[0]
        # Batch tile >= 128 rows so the MXU sees full passes and the ~0.35us/step
        # grid overhead amortizes; clamp to the lane-rounded batch.
        tile = min(default_tile, max(LANE, _round_up(batch, LANE)))
        if is_v7x and tile > LANE and _round_up(batch, tile) == tile:
            tile = max(LANE, tile // 2)   # keep >= 2 grid steps so both TCs work
        b_pad = _round_up(batch, tile)

        # bf16 input halves the streamed HBM->VMEM bytes; LN math stays f32.
        x_p = jnp.zeros((b_pad, in_pad), jnp.bfloat16).at[:batch, :input_size].set(
            x.astype(jnp.bfloat16))

        # Explicit VMEM budget: resident params (+x2 if double-buffered) +
        # double-buffered x/out tiles + live-activation headroom.
        pbytes = param_bytes * (1 if single_buffer_params else 2)
        tile_bytes = 2 * (tile * in_pad * 2 + tile * out_pad * 4)
        act_bytes = 4 * tile * max_pad * 4
        vmem_limit = int(min(max(2 * (pbytes + tile_bytes + act_bytes), 32 << 20),
                             64 << 20))

        out = pl.pallas_call(
            kernel,
            out_shape=jax.ShapeDtypeStruct((b_pad, out_pad), jnp.float32),
            grid_spec=pltpu.PrefetchScalarGridSpec(
                num_scalar_prefetch=0,
                grid=(b_pad // tile,),
                in_specs=[pl.BlockSpec((tile, in_pad), lambda b: (b, 0))]
                + param_specs,
                out_specs=pl.BlockSpec((tile, out_pad), lambda b: (b, 0)),
            ),
            compiler_params=pltpu.CompilerParams(
                dimension_semantics=("parallel",),
                vmem_limit_bytes=vmem_limit,
            ),
        )(x_p, *flat_params)
        return out[:batch, :output_size]

    return forward


def reference_f32(x, ref_layers, ref_final):
    """Module-faithful f32 reference (eval mode: dropout = identity)."""
    h = x.astype(jnp.float32)
    for w, b, g, bt in ref_layers:
        h = h @ w + b
        mean = jnp.mean(h, axis=-1, keepdims=True)
        var = jnp.mean((h - mean) ** 2, axis=-1, keepdims=True)
        h = (h - mean) / jnp.sqrt(var + LN_EPS) * g + bt
        h = jnp.maximum(h, 0.0)
    w, b = ref_final
    return h @ w + b


def reference_mirror(x, ref_layers, ref_final):
    """Reference mirroring the kernel math (bf16 matmul operands, two-pass f32 LN)."""
    h = x.astype(jnp.float32)
    for w, b, g, bt in ref_layers:
        acc = jnp.dot(h.astype(jnp.bfloat16), w.astype(jnp.bfloat16),
                      preferred_element_type=jnp.float32) + b
        mean = jnp.mean(acc, axis=-1, keepdims=True)
        var = jnp.mean((acc - mean) ** 2, axis=-1, keepdims=True)
        h = jnp.maximum((acc - mean) * jax.lax.rsqrt(var + LN_EPS) * g + bt, 0.0)
    w, b = ref_final
    return jnp.dot(h.astype(jnp.bfloat16), w.astype(jnp.bfloat16),
                   preferred_element_type=jnp.float32) + b


if __name__ == "__main__":
    # Small shapes consistent with the module: batch=8, input_size=32,
    # layers_config=[64, 32], output_size=16.
    batch = 8
    input_size = 32
    output_size = 16
    layers_config = [64, 32]

    key = jax.random.PRNGKey(0)
    key, kx = jax.random.split(key)
    x = jax.random.normal(kx, (batch, input_size), jnp.float32)

    flat_params, ref_layers, ref_final = init_params(
        key, input_size, output_size, layers_config)

    try:
        forward = make_cpd_forward(input_size, output_size, layers_config,
                                   single_buffer_params=True)
        out = jax.block_until_ready(forward(x, flat_params))
    except Exception:
        # Fallback if this JAX build rejects pipeline_mode=pl.Buffered(1).
        forward = make_cpd_forward(input_size, output_size, layers_config,
                                   single_buffer_params=False)
        out = jax.block_until_ready(forward(x, flat_params))

    assert out.shape == (batch, output_size), out.shape

    ref_m = reference_mirror(x, ref_layers, ref_final)   # same math as kernel
    ref_e = reference_f32(x, ref_layers, ref_final)      # module semantics, f32
    err_m = float(jnp.max(jnp.abs(out - ref_m)))
    err_e = float(jnp.max(jnp.abs(out - ref_e)))
    assert err_m < 5e-3, f"mismatch vs bf16-mirror reference: {err_m}"
    assert err_e < 5e-2, f"mismatch vs f32 module reference: {err_e}"

    print("KERNEL_OK")
</pallas_src>

<mosaic_0001>
module attributes {stable_mosaic.version = 11 : i64} {
  func.func @kernel(%arg0: i32, %arg1: memref<128x128xbf16, #tpu.memory_space<vmem>>, %arg2: memref<128x128xbf16, #tpu.memory_space<vmem>>, %arg3: memref<4x128xf32, #tpu.memory_space<vmem>>, %arg4: memref<128x128xbf16, #tpu.memory_space<vmem>>, %arg5: memref<4x128xf32, #tpu.memory_space<vmem>>, %arg6: memref<128x128xbf16, #tpu.memory_space<vmem>>, %arg7: memref<1x128xf32, #tpu.memory_space<vmem>>, %arg8: memref<128x128xf32, #tpu.memory_space<vmem>>) attributes {dimension_semantics = [#tpu.dimension_semantics<parallel>], iteration_bounds = array<i64: 1>, scalar_prefetch = 0 : i64, scratch_operands = 0 : i64, tpu.core_type = #tpu.core_type<tc>, window_params = [{transform_indices = @transform_0, window_bounds = array<i64: 128, 128>}, {pipeline_mode = #tpu.pipeline_mode<synchronous>, transform_indices = @transform_1, window_bounds = array<i64: 128, 128>}, {pipeline_mode = #tpu.pipeline_mode<synchronous>, transform_indices = @transform_2, window_bounds = array<i64: 4, 128>}, {pipeline_mode = #tpu.pipeline_mode<synchronous>, transform_indices = @transform_3, window_bounds = array<i64: 128, 128>}, {pipeline_mode = #tpu.pipeline_mode<synchronous>, transform_indices = @transform_4, window_bounds = array<i64: 4, 128>}, {pipeline_mode = #tpu.pipeline_mode<synchronous>, transform_indices = @transform_5, window_bounds = array<i64: 128, 128>}, {pipeline_mode = #tpu.pipeline_mode<synchronous>, transform_indices = @transform_6, window_bounds = array<i64: 1, 128>}, {transform_indices = @transform_7, window_bounds = array<i64: 128, 128>}]} {
    %c0 = arith.constant 0 : index
    %c0_0 = arith.constant 0 : index
    %0 = vector.load %arg1[%c0, %c0_0] : memref<128x128xbf16, #tpu.memory_space<vmem>>, vector<128x128xbf16>
    %c0_1 = arith.constant 0 : index
    %c0_2 = arith.constant 0 : index
    %1 = vector.load %arg2[%c0_1, %c0_2] : memref<128x128xbf16, #tpu.memory_space<vmem>>, vector<128x128xbf16>
    %c0_3 = arith.constant 0 : index
    %c0_4 = arith.constant 0 : index
    %2 = vector.load %arg3[%c0_3, %c0_4] : memref<4x128xf32, #tpu.memory_space<vmem>>, vector<4x128xf32>
    %3 = vector.extract_strided_slice %2 {offsets = [0, 0], sizes = [1, 128], strides = [1, 1]} : vector<4x128xf32> to vector<1x128xf32>
    %4 = vector.extract_strided_slice %2 {offsets = [1, 0], sizes = [1, 128], strides = [1, 1]} : vector<4x128xf32> to vector<1x128xf32>
    %5 = vector.extract_strided_slice %2 {offsets = [2, 0], sizes = [1, 128], strides = [1, 1]} : vector<4x128xf32> to vector<1x128xf32>
    %6 = vector.extract_strided_slice %2 {offsets = [3, 0], sizes = [1, 128], strides = [1, 1]} : vector<4x128xf32> to vector<1x128xf32>
    %cst = arith.constant dense<0.000000e+00> : vector<128x128xf32>
    %7 = tpu.matmul %0, %1, %cst {dimension_numbers = #tpu.dot_dimension_numbers<[1], [0], [0], [1], [0, 0, 1, 1], [], []>} : vector<128x128xbf16>, vector<128x128xbf16>, vector<128x128xf32> -> vector<128x128xf32>
    %8 = vector.broadcast %3 : vector<1x128xf32> to vector<128x128xf32>
    %9 = arith.addf %7, %8 : vector<128x128xf32>
    %10 = vector.broadcast %6 : vector<1x128xf32> to vector<128x128xf32>
    %11 = arith.mulf %9, %10 : vector<128x128xf32>
    %cst_5 = arith.constant dense<0.000000e+00> : vector<128xf32>
    %12 = vector.multi_reduction <add>, %11, %cst_5 [1] : vector<128x128xf32> to vector<128xf32>
    %13 = vector.shape_cast %12 : vector<128xf32> to vector<128x1xf32>
    %cst_6 = arith.constant 1.562500e-02 : f32
    %14 = vector.broadcast %cst_6 : f32 to vector<128x1xf32>
    %15 = arith.mulf %13, %14 : vector<128x1xf32>
    %16 = vector.broadcast %15 : vector<128x1xf32> to vector<128x128xf32>
    %17 = arith.subf %11, %16 : vector<128x128xf32>
    %18 = vector.broadcast %6 : vector<1x128xf32> to vector<128x128xf32>
    %19 = arith.mulf %17, %18 : vector<128x128xf32>
    %20 = arith.mulf %19, %19 : vector<128x128xf32>
    %cst_7 = arith.constant dense<0.000000e+00> : vector<128xf32>
    %21 = vector.multi_reduction <add>, %20, %cst_7 [1] : vector<128x128xf32> to vector<128xf32>
    %22 = vector.shape_cast %21 : vector<128xf32> to vector<128x1xf32>
    %cst_8 = arith.constant 1.562500e-02 : f32
    %23 = vector.broadcast %cst_8 : f32 to vector<128x1xf32>
    %24 = arith.mulf %22, %23 : vector<128x1xf32>
    %cst_9 = arith.constant 9.99999974E-6 : f32
    %25 = vector.broadcast %cst_9 : f32 to vector<128x1xf32>
    %26 = arith.addf %24, %25 : vector<128x1xf32>
    %27 = math.rsqrt %26 : vector<128x1xf32>
    %28 = vector.broadcast %27 : vector<128x1xf32> to vector<128x128xf32>
    %29 = arith.mulf %19, %28 : vector<128x128xf32>
    %30 = vector.broadcast %4 : vector<1x128xf32> to vector<128x128xf32>
    %31 = arith.mulf %29, %30 : vector<128x128xf32>
    %32 = vector.broadcast %5 : vector<1x128xf32> to vector<128x128xf32>
    %33 = arith.addf %31, %32 : vector<128x128xf32>
    %cst_10 = arith.constant 0.000000e+00 : f32
    %34 = vector.broadcast %cst_10 : f32 to vector<128x128xf32>
    %35 = arith.maximumf %33, %34 : vector<128x128xf32>
    %36 = vector.broadcast %6 : vector<1x128xf32> to vector<128x128xf32>
    %37 = arith.mulf %35, %36 : vector<128x128xf32>
    %38 = arith.truncf %37 : vector<128x128xf32> to vector<128x128xbf16>
    %c0_11 = arith.constant 0 : index
    %c0_12 = arith.constant 0 : index
    %39 = vector.load %arg4[%c0_11, %c0_12] : memref<128x128xbf16, #tpu.memory_space<vmem>>, vector<128x128xbf16>
    %c0_13 = arith.constant 0 : index
    %c0_14 = arith.constant 0 : index
    %40 = vector.load %arg5[%c0_13, %c0_14] : memref<4x128xf32, #tpu.memory_space<vmem>>, vector<4x128xf32>
    %41 = vector.extract_strided_slice %40 {offsets = [0, 0], sizes = [1, 128], strides = [1, 1]} : vector<4x128xf32> to vector<1x128xf32>
    %42 = vector.extract_strided_slice %40 {offsets = [1, 0], sizes = [1, 128], strides = [1, 1]} : vector<4x128xf32> to vector<1x128xf32>
    %43 = vector.extract_strided_slice %40 {offsets = [2, 0], sizes = [1, 128], strides = [1, 1]} : vector<4x128xf32> to vector<1x128xf32>
    %44 = vector.extract_strided_slice %40 {offsets = [3, 0], sizes = [1, 128], strides = [1, 1]} : vector<4x128xf32> to vector<1x128xf32>
    %cst_15 = arith.constant dense<0.000000e+00> : vector<128x128xf32>
    %45 = tpu.matmul %38, %39, %cst_15 {dimension_numbers = #tpu.dot_dimension_numbers<[1], [0], [0], [1], [0, 0, 1, 1], [], []>} : vector<128x128xbf16>, vector<128x128xbf16>, vector<128x128xf32> -> vector<128x128xf32>
    %46 = vector.broadcast %41 : vector<1x128xf32> to vector<128x128xf32>
    %47 = arith.addf %45, %46 : vector<128x128xf32>
    %48 = vector.broadcast %44 : vector<1x128xf32> to vector<128x128xf32>
    %49 = arith.mulf %47, %48 : vector<128x128xf32>
    %cst_16 = arith.constant dense<0.000000e+00> : vector<128xf32>
    %50 = vector.multi_reduction <add>, %49, %cst_16 [1] : vector<128x128xf32> to vector<128xf32>
    %51 = vector.shape_cast %50 : vector<128xf32> to vector<128x1xf32>
    %cst_17 = arith.constant 3.125000e-02 : f32
    %52 = vector.broadcast %cst_17 : f32 to vector<128x1xf32>
    %53 = arith.mulf %51, %52 : vector<128x1xf32>
    %54 = vector.broadcast %53 : vector<128x1xf32> to vector<128x128xf32>
    %55 = arith.subf %49, %54 : vector<128x128xf32>
    %56 = vector.broadcast %44 : vector<1x128xf32> to vector<128x128xf32>
    %57 = arith.mulf %55, %56 : vector<128x128xf32>
    %58 = arith.mulf %57, %57 : vector<128x128xf32>
    %cst_18 = arith.constant dense<0.000000e+00> : vector<128xf32>
    %59 = vector.multi_reduction <add>, %58, %cst_18 [1] : vector<128x128xf32> to vector<128xf32>
    %60 = vector.shape_cast %59 : vector<128xf32> to vector<128x1xf32>
    %cst_19 = arith.constant 3.125000e-02 : f32
    %61 = vector.broadcast %cst_19 : f32 to vector<128x1xf32>
    %62 = arith.mulf %60, %61 : vector<128x1xf32>
    %cst_20 = arith.constant 9.99999974E-6 : f32
    %63 = vector.broadcast %cst_20 : f32 to vector<128x1xf32>
    %64 = arith.addf %62, %63 : vector<128x1xf32>
    %65 = math.rsqrt %64 : vector<128x1xf32>
    %66 = vector.broadcast %65 : vector<128x1xf32> to vector<128x128xf32>
    %67 = arith.mulf %57, %66 : vector<128x128xf32>
    %68 = vector.broadcast %42 : vector<1x128xf32> to vector<128x128xf32>
    %69 = arith.mulf %67, %68 : vector<128x128xf32>
    %70 = vector.broadcast %43 : vector<1x128xf32> to vector<128x128xf32>
    %71 = arith.addf %69, %70 : vector<128x128xf32>
    %cst_21 = arith.constant 0.000000e+00 : f32
    %72 = vector.broadcast %cst_21 : f32 to vector<128x128xf32>
    %73 = arith.maximumf %71, %72 : vector<128x128xf32>
    %74 = vector.broadcast %44 : vector<1x128xf32> to vector<128x128xf32>
    %75 = arith.mulf %73, %74 : vector<128x128xf32>
    %76 = arith.truncf %75 : vector<128x128xf32> to vector<128x128xbf16>
    %c0_22 = arith.constant 0 : index
    %c0_23 = arith.constant 0 : index
    %77 = vector.load %arg6[%c0_22, %c0_23] : memref<128x128xbf16, #tpu.memory_space<vmem>>, vector<128x128xbf16>
    %c0_24 = arith.constant 0 : index
    %c0_25 = arith.constant 0 : index
    %78 = vector.load %arg7[%c0_24, %c0_25] : memref<1x128xf32, #tpu.memory_space<vmem>>, vector<1x128xf32>
    %cst_26 = arith.constant dense<0.000000e+00> : vector<128x128xf32>
    %79 = tpu.matmul %76, %77, %cst_26 {dimension_numbers = #tpu.dot_dimension_numbers<[1], [0], [0], [1], [0, 0, 1, 1], [], []>} : vector<128x128xbf16>, vector<128x128xbf16>, vector<128x128xf32> -> vector<128x128xf32>
    %80 = vector.broadcast %78 : vector<1x128xf32> to vector<128x128xf32>
    %81 = arith.addf %79, %80 : vector<128x128xf32>
    %c0_27 = arith.constant 0 : index
    %c0_28 = arith.constant 0 : index
    %82 = vector.load %arg8[%c0_27, %c0_28] : memref<128x128xf32, #tpu.memory_space<vmem>>, vector<128x128xf32>
    tpu.vector_store %arg8[%c0_27, %c0_28], %81 {strides = array<i32>} : memref<128x128xf32, #tpu.memory_space<vmem>>, vector<128x128xf32>,
    return
  }
  func.func @transform_0(%arg0: i32) -> (i32, i32) {
    %c0_i32 = arith.constant 0 : i32
    %c0_i32_0 = arith.constant 0 : i32
    return %arg0, %c0_i32 : i32, i32
  }
  func.func @transform_1(%arg0: i32) -> (i32, i32) {
    %c0_i32 = arith.constant 0 : i32
    %c0_i32_0 = arith.constant 0 : i32
    %c0_i32_1 = arith.constant 0 : i32
    return %c0_i32, %c0_i32_0 : i32, i32
  }
  func.func @transform_2(%arg0: i32) -> (i32, i32) {
    %c0_i32 = arith.constant 0 : i32
    %c0_i32_0 = arith.constant 0 : i32
    %c0_i32_1 = arith.constant 0 : i32
    return %c0_i32, %c0_i32_0 : i32, i32
  }
  func.func @transform_3(%arg0: i32) -> (i32, i32) {
    %c0_i32 = arith.constant 0 : i32
    %c0_i32_0 = arith.constant 0 : i32
    %c0_i32_1 = arith.constant 0 : i32
    return %c0_i32, %c0_i32_0 : i32, i32
  }
  func.func @transform_4(%arg0: i32) -> (i32, i32) {
    %c0_i32 = arith.constant 0 : i32
    %c0_i32_0 = arith.constant 0 : i32
    %c0_i32_1 = arith.constant 0 : i32
    return %c0_i32, %c0_i32_0 : i32, i32
  }
  func.func @transform_5(%arg0: i32) -> (i32, i32) {
    %c0_i32 = arith.constant 0 : i32
    %c0_i32_0 = arith.constant 0 : i32
    %c0_i32_1 = arith.constant 0 : i32
    return %c0_i32, %c0_i32_0 : i32, i32
  }
  func.func @transform_6(%arg0: i32) -> (i32, i32) {
    %c0_i32 = arith.constant 0 : i32
    %c0_i32_0 = arith.constant 0 : i32
    %c0_i32_1 = arith.constant 0 : i32
    return %c0_i32, %c0_i32_0 : i32, i32
  }
  func.func @transform_7(%arg0: i32) -> (i32, i32) {
    %c0_i32 = arith.constant 0 : i32
    %c0_i32_0 = arith.constant 0 : i32
    return %arg0, %c0_i32 : i32, i32
  }
}

module attributes {stable_mosaic.version = 11 : i64} {
  func.func @kernel(%arg0: i32, %arg1: memref<128x128xbf16, #tpu.memory_space<vmem>>, %arg2: memref<128x128xbf16, #tpu.memory_space<vmem>>, %arg3: memref<4x128xf32, #tpu.memory_space<vmem>>, %arg4: memref<128x128xbf16, #tpu.memory_space<vmem>>, %arg5: memref<4x128xf32, #tpu.memory_space<vmem>>, %arg6: memref<128x128xbf16, #tpu.memory_space<vmem>>, %arg7: memref<1x128xf32, #tpu.memory_space<vmem>>, %arg8: memref<128x128xf32, #tpu.memory_space<vmem>>) attributes {dimension_semantics = [#tpu.dimension_semantics<parallel>], iteration_bounds = array<i64: 1>, scalar_prefetch = 0 : i64, scratch_operands = 0 : i64, tpu.core_type = #tpu.core_type<tc>, window_params = [{transform_indices = @transform_0, window_bounds = array<i64: 128, 128>}, {pipeline_mode = #tpu.pipeline_mode<synchronous>, transform_indices = @transform_1, window_bounds = array<i64: 128, 128>}, {pipeline_mode = #tpu.pipeline_mode<synchronous>, transform_indices = @transform_2, window_bounds = array<i64: 4, 128>}, {pipeline_mode = #tpu.pipeline_mode<synchronous>, transform_indices = @transform_3, window_bounds = array<i64: 128, 128>}, {pipeline_mode = #tpu.pipeline_mode<synchronous>, transform_indices = @transform_4, window_bounds = array<i64: 4, 128>}, {pipeline_mode = #tpu.pipeline_mode<synchronous>, transform_indices = @transform_5, window_bounds = array<i64: 128, 128>}, {pipeline_mode = #tpu.pipeline_mode<synchronous>, transform_indices = @transform_6, window_bounds = array<i64: 1, 128>}, {transform_indices = @transform_7, window_bounds = array<i64: 128, 128>}]} {
    %c0 = arith.constant 0 : index
    %c0_0 = arith.constant 0 : index
    %0 = vector.load %arg1[%c0, %c0_0] : memref<128x128xbf16, #tpu.memory_space<vmem>>, vector<128x128xbf16>
    %c0_1 = arith.constant 0 : index
    %c0_2 = arith.constant 0 : index
    %1 = vector.load %arg2[%c0_1, %c0_2] : memref<128x128xbf16, #tpu.memory_space<vmem>>, vector<128x128xbf16>
    %c0_3 = arith.constant 0 : index
    %c0_4 = arith.constant 0 : index
    %2 = vector.load %arg3[%c0_3, %c0_4] : memref<4x128xf32, #tpu.memory_space<vmem>>, vector<4x128xf32>
    %3 = vector.extract_strided_slice %2 {offsets = [0, 0], sizes = [1, 128], strides = [1, 1]} : vector<4x128xf32> to vector<1x128xf32>
    %4 = vector.extract_strided_slice %2 {offsets = [1, 0], sizes = [1, 128], strides = [1, 1]} : vector<4x128xf32> to vector<1x128xf32>
    %5 = vector.extract_strided_slice %2 {offsets = [2, 0], sizes = [1, 128], strides = [1, 1]} : vector<4x128xf32> to vector<1x128xf32>
    %6 = vector.extract_strided_slice %2 {offsets = [3, 0], sizes = [1, 128], strides = [1, 1]} : vector<4x128xf32> to vector<1x128xf32>
    %cst = arith.constant dense<0.000000e+00> : vector<128x128xf32>
    %7 = tpu.matmul %0, %1, %cst {dimension_numbers = #tpu.dot_dimension_numbers<[1], [0], [0], [1], [0, 0, 1, 1], [], []>} : vector<128x128xbf16>, vector<128x128xbf16>, vector<128x128xf32> -> vector<128x128xf32>
    %8 = vector.broadcast %3 : vector<1x128xf32> to vector<128x128xf32>
    %9 = arith.addf %7, %8 : vector<128x128xf32>
    %10 = vector.broadcast %6 : vector<1x128xf32> to vector<128x128xf32>
    %11 = arith.mulf %9, %10 : vector<128x128xf32>
    %cst_5 = arith.constant dense<0.000000e+00> : vector<128xf32>
    %12 = vector.multi_reduction <add>, %11, %cst_5 [1] : vector<128x128xf32> to vector<128xf32>
    %13 = vector.shape_cast %12 : vector<128xf32> to vector<128x1xf32>
    %cst_6 = arith.constant 1.562500e-02 : f32
    %14 = vector.broadcast %cst_6 : f32 to vector<128x1xf32>
    %15 = arith.mulf %13, %14 : vector<128x1xf32>
    %16 = vector.broadcast %15 : vector<128x1xf32> to vector<128x128xf32>
    %17 = arith.subf %11, %16 : vector<128x128xf32>
    %18 = vector.broadcast %6 : vector<1x128xf32> to vector<128x128xf32>
    %19 = arith.mulf %17, %18 : vector<128x128xf32>
    %20 = arith.mulf %19, %19 : vector<128x128xf32>
    %cst_7 = arith.constant dense<0.000000e+00> : vector<128xf32>
    %21 = vector.multi_reduction <add>, %20, %cst_7 [1] : vector<128x128xf32> to vector<128xf32>
    %22 = vector.shape_cast %21 : vector<128xf32> to vector<128x1xf32>
    %cst_8 = arith.constant 1.562500e-02 : f32
    %23 = vector.broadcast %cst_8 : f32 to vector<128x1xf32>
    %24 = arith.mulf %22, %23 : vector<128x1xf32>
    %cst_9 = arith.constant 9.99999974E-6 : f32
    %25 = vector.broadcast %cst_9 : f32 to vector<128x1xf32>
    %26 = arith.addf %24, %25 : vector<128x1xf32>
    %27 = math.rsqrt %26 : vector<128x1xf32>
    %28 = vector.broadcast %27 : vector<128x1xf32> to vector<128x128xf32>
    %29 = arith.mulf %19, %28 : vector<128x128xf32>
    %30 = vector.broadcast %4 : vector<1x128xf32> to vector<128x128xf32>
    %31 = arith.mulf %29, %30 : vector<128x128xf32>
    %32 = vector.broadcast %5 : vector<1x128xf32> to vector<128x128xf32>
    %33 = arith.addf %31, %32 : vector<128x128xf32>
    %cst_10 = arith.constant 0.000000e+00 : f32
    %34 = vector.broadcast %cst_10 : f32 to vector<128x128xf32>
    %35 = arith.maximumf %33, %34 : vector<128x128xf32>
    %36 = vector.broadcast %6 : vector<1x128xf32> to vector<128x128xf32>
    %37 = arith.mulf %35, %36 : vector<128x128xf32>
    %38 = arith.truncf %37 : vector<128x128xf32> to vector<128x128xbf16>
    %c0_11 = arith.constant 0 : index
    %c0_12 = arith.constant 0 : index
    %39 = vector.load %arg4[%c0_11, %c0_12] : memref<128x128xbf16, #tpu.memory_space<vmem>>, vector<128x128xbf16>
    %c0_13 = arith.constant 0 : index
    %c0_14 = arith.constant 0 : index
    %40 = vector.load %arg5[%c0_13, %c0_14] : memref<4x128xf32, #tpu.memory_space<vmem>>, vector<4x128xf32>
    %41 = vector.extract_strided_slice %40 {offsets = [0, 0], sizes = [1, 128], strides = [1, 1]} : vector<4x128xf32> to vector<1x128xf32>
    %42 = vector.extract_strided_slice %40 {offsets = [1, 0], sizes = [1, 128], strides = [1, 1]} : vector<4x128xf32> to vector<1x128xf32>
    %43 = vector.extract_strided_slice %40 {offsets = [2, 0], sizes = [1, 128], strides = [1, 1]} : vector<4x128xf32> to vector<1x128xf32>
    %44 = vector.extract_strided_slice %40 {offsets = [3, 0], sizes = [1, 128], strides = [1, 1]} : vector<4x128xf32> to vector<1x128xf32>
    %cst_15 = arith.constant dense<0.000000e+00> : vector<128x128xf32>
    %45 = tpu.matmul %38, %39, %cst_15 {dimension_numbers = #tpu.dot_dimension_numbers<[1], [0], [0], [1], [0, 0, 1, 1], [], []>} : vector<128x128xbf16>, vector<128x128xbf16>, vector<128x128xf32> -> vector<128x128xf32>
    %46 = vector.broadcast %41 : vector<1x128xf32> to vector<128x128xf32>
    %47 = arith.addf %45, %46 : vector<128x128xf32>
    %48 = vector.broadcast %44 : vector<1x128xf32> to vector<128x128xf32>
    %49 = arith.mulf %47, %48 : vector<128x128xf32>
    %cst_16 = arith.constant dense<0.000000e+00> : vector<128xf32>
    %50 = vector.multi_reduction <add>, %49, %cst_16 [1] : vector<128x128xf32> to vector<128xf32>
    %51 = vector.shape_cast %50 : vector<128xf32> to vector<128x1xf32>
    %cst_17 = arith.constant 3.125000e-02 : f32
    %52 = vector.broadcast %cst_17 : f32 to vector<128x1xf32>
    %53 = arith.mulf %51, %52 : vector<128x1xf32>
    %54 = vector.broadcast %53 : vector<128x1xf32> to vector<128x128xf32>
    %55 = arith.subf %49, %54 : vector<128x128xf32>
    %56 = vector.broadcast %44 : vector<1x128xf32> to vector<128x128xf32>
    %57 = arith.mulf %55, %56 : vector<128x128xf32>
    %58 = arith.mulf %57, %57 : vector<128x128xf32>
    %cst_18 = arith.constant dense<0.000000e+00> : vector<128xf32>
    %59 = vector.multi_reduction <add>, %58, %cst_18 [1] : vector<128x128xf32> to vector<128xf32>
    %60 = vector.shape_cast %59 : vector<128xf32> to vector<128x1xf32>
    %cst_19 = arith.constant 3.125000e-02 : f32
    %61 = vector.broadcast %cst_19 : f32 to vector<128x1xf32>
    %62 = arith.mulf %60, %61 : vector<128x1xf32>
    %cst_20 = arith.constant 9.99999974E-6 : f32
    %63 = vector.broadcast %cst_20 : f32 to vector<128x1xf32>
    %64 = arith.addf %62, %63 : vector<128x1xf32>
    %65 = math.rsqrt %64 : vector<128x1xf32>
    %66 = vector.broadcast %65 : vector<128x1xf32> to vector<128x128xf32>
    %67 = arith.mulf %57, %66 : vector<128x128xf32>
    %68 = vector.broadcast %42 : vector<1x128xf32> to vector<128x128xf32>
    %69 = arith.mulf %67, %68 : vector<128x128xf32>
    %70 = vector.broadcast %43 : vector<1x128xf32> to vector<128x128xf32>
    %71 = arith.addf %69, %70 : vector<128x128xf32>
    %cst_21 = arith.constant 0.000000e+00 : f32
    %72 = vector.broadcast %cst_21 : f32 to vector<128x128xf32>
    %73 = arith.maximumf %71, %72 : vector<128x128xf32>
    %74 = vector.broadcast %44 : vector<1x128xf32> to vector<128x128xf32>
    %75 = arith.mulf %73, %74 : vector<128x128xf32>
    %76 = arith.truncf %75 : vector<128x128xf32> to vector<128x128xbf16>
    %c0_22 = arith.constant 0 : index
    %c0_23 = arith.constant 0 : index
    %77 = vector.load %arg6[%c0_22, %c0_23] : memref<128x128xbf16, #tpu.memory_space<vmem>>, vector<128x128xbf16>
    %c0_24 = arith.constant 0 : index
    %c0_25 = arith.constant 0 : index
    %78 = vector.load %arg7[%c0_24, %c0_25] : memref<1x128xf32, #tpu.memory_space<vmem>>, vector<1x128xf32>
    %cst_26 = arith.constant dense<0.000000e+00> : vector<128x128xf32>
    %79 = tpu.matmul %76, %77, %cst_26 {dimension_numbers = #tpu.dot_dimension_numbers<[1], [0], [0], [1], [0, 0, 1, 1], [], []>} : vector<128x128xbf16>, vector<128x128xbf16>, vector<128x128xf32> -> vector<128x128xf32>
    %80 = vector.broadcast %78 : vector<1x128xf32> to vector<128x128xf32>
    %81 = arith.addf %79, %80 : vector<128x128xf32>
    %c0_27 = arith.constant 0 : index
    %c0_28 = arith.constant 0 : index
    %82 = vector.load %arg8[%c0_27, %c0_28] : memref<128x128xf32, #tpu.memory_space<vmem>>, vector<128x128xf32>
    tpu.vector_store %arg8[%c0_27, %c0_28], %81 {strides = array<i32>} : memref<128x128xf32, #tpu.memory_space<vmem>>, vector<128x128xf32>,
    return
  }
  func.func @transform_0(%arg0: i32) -> (i32, i32) {
    %c0_i32 = arith.constant 0 : i32
    %c0_i32_0 = arith.constant 0 : i32
    return %arg0, %c0_i32 : i32, i32
  }
  func.func @transform_1(%arg0: i32) -> (i32, i32) {
    %c0_i32 = arith.constant 0 : i32
    %c0_i32_0 = arith.constant 0 : i32
    %c0_i32_1 = arith.constant 0 : i32
    return %c0_i32, %c0_i32_0 : i32, i32
  }
  func.func @transform_2(%arg0: i32) -> (i32, i32) {
    %c0_i32 = arith.constant 0 : i32
    %c0_i32_0 = arith.constant 0 : i32
    %c0_i32_1 = arith.constant 0 : i32
    return %c0_i32, %c0_i32_0 : i32, i32
  }
  func.func @transform_3(%arg0: i32) -> (i32, i32) {
    %c0_i32 = arith.constant 0 : i32
    %c0_i32_0 = arith.constant 0 : i32
    %c0_i32_1 = arith.constant 0 : i32
    return %c0_i32, %c0_i32_0 : i32, i32
  }
  func.func @transform_4(%arg0: i32) -> (i32, i32) {
    %c0_i32 = arith.constant 0 : i32
    %c0_i32_0 = arith.constant 0 : i32
    %c0_i32_1 = arith.constant 0 : i32
    return %c0_i32, %c0_i32_0 : i32, i32
  }
  func.func @transform_5(%arg0: i32) -> (i32, i32) {
    %c0_i32 = arith.constant 0 : i32
    %c0_i32_0 = arith.constant 0 : i32
    %c0_i32_1 = arith.constant 0 : i32
    return %c0_i32, %c0_i32_0 : i32, i32
  }
  func.func @transform_6(%arg0: i32) -> (i32, i32) {
    %c0_i32 = arith.constant 0 : i32
    %c0_i32_0 = arith.constant 0 : i32
    %c0_i32_1 = arith.constant 0 : i32
    return %c0_i32, %c0_i32_0 : i32, i32
  }
  func.func @transform_7(%arg0: i32) -> (i32, i32) {
    %c0_i32 = arith.constant 0 : i32
    %c0_i32_0 = arith.constant 0 : i32
    return %arg0, %c0_i32 : i32, i32
  }
}

</mosaic_0001>

<llo_original>
// kernel: forward.1
$region0: #{forward.1}
  #allocation0 [shape = 'u32[]', space=smem, size = 0x4, offset = 0x4, fixed_abs, tag = 'smem constant byte address 0x4 - core index']
  #allocation1 [shape = 'u32[144,128]{1,0:T(1,128)}', space=vmem, size = 0x12000, scoped, tag = 'internal scratch']
  %s0 = inlined_call_operand.vmem [shape: bf16[128,128], index: 0, kind: input, shape index: {}]
  %s1 = inlined_call_operand.vmem [shape: bf16[128,128], index: 1, kind: input, shape index: {}]
  %s2 = inlined_call_operand.vmem [shape: f32[4,128], index: 2, kind: input, shape index: {}]
  %s3 = inlined_call_operand.hbm [shape: bf16[128,128], index: 3, kind: input, shape index: {}]
  %s4 = inlined_call_operand.vmem [shape: f32[4,128], index: 4, kind: input, shape index: {}]
  %s5 = inlined_call_operand.hbm [shape: bf16[128,128], index: 5, kind: input, shape index: {}]
  %s6 = inlined_call_operand.vmem [shape: f32[1,128], index: 6, kind: input, shape index: {}]
  %s7 = inlined_call_operand.vmem [shape: f32[128,128], index: 7, kind: output, shape index: {}]
  %s8 = sld [smem:[#allocation0]]
  $region46: #{forward.1} parent=0
    _
  %s10 = ssub.s32 1, %s8
  %s11 = scalar_select 0, %s10, %s8
  $region1: #{forward.1} parent=0
    #allocation2 [shape = 'u8[32768]{0}', space=vmem, size = 0x8000, scoped, tag = 'input window, operand 3, single buffered']
    #allocation3 [shape = 's32[1]{0}', space=sflag, size = 0x4, scoped, tag = 'scoped memory for forward.1']
    #allocation4 [shape = 'u8[32768]{0}', space=vmem, size = 0x8000, scoped, tag = 'input window, operand 5, single buffered']
    #allocation5 [shape = 's32[1]{0}', space=sflag, size = 0x4, scoped, tag = 'scoped memory for forward.1']
    %12 = vsyncpa [#allocation3], 0
    %13 = vsyncpa [#allocation5], 0
    // Predicated region
    $region2: #{forward.1} parent=1 // pred_check
      _
    $region3: #{forward.1} parent=1 // pred_check_branch
      %15 = sbr.rel (0) target = $region5
    $region4: #{forward.1} parent=1 // pred_region
      _
    $region5: #{forward.1} parent=1 // pred_fallthru
      _
    // Predicated region
    $region6: #{forward.1} parent=1 // pred_check
      _
    $region7: #{forward.1} parent=1 // pred_check_branch
      %17 = sbr.rel (0) target = $region9
    $region8: #{forward.1} parent=1 // pred_region
      _
    $region9: #{forward.1} parent=1 // pred_fallthru
      _
    // Predicated region
    $region10: #{forward.1} parent=1 // pred_check
      _
    $region11: #{forward.1} parent=1 // pred_check_branch
      %19 = sbr.rel (0) target = $region13
    $region12: #{forward.1} parent=1 // pred_region
      _
    $region13: #{forward.1} parent=1 // pred_fallthru
      _
    // Predicated region
    $region14: #{forward.1} parent=1 // pred_check
      _
    $region15: #{forward.1} parent=1 // pred_check_branch
      %21 = sbr.rel (0) target = $region17
    $region16: #{forward.1} parent=1 // pred_region
      %s23 = ssub.s32 1024, 1024
      %24 = vsyncadd [#allocation3], %s23
      %s25 = sshll.u32 [#allocation2], 4
      %s26 = int_to_ptr.vmem [resolvable:$true] %s25
      %31 = dma.hbm_to_vmem [thread:$0]  %s3, 1024, %s26, [#allocation3], 64, 64, 4
    $region17: #{forward.1} parent=1 // pred_fallthru
      _
    // Predicated region
    $region18: #{forward.1} parent=1 // pred_check
      _
    $region19: #{forward.1} parent=1 // pred_check_branch
      %33 = sbr.rel (0) target = $region21
    $region20: #{forward.1} parent=1 // pred_region
      _
    $region21: #{forward.1} parent=1 // pred_fallthru
      _
    // Predicated region
    $region22: #{forward.1} parent=1 // pred_check
      _
    $region23: #{forward.1} parent=1 // pred_check_branch
      %35 = sbr.rel (0) target = $region25
    $region24: #{forward.1} parent=1 // pred_region
      %s37 = ssub.s32 1024, 1024
      %38 = vsyncadd [#allocation5], %s37
      %s39 = sshll.u32 [#allocation4], 4
      %s40 = int_to_ptr.vmem [resolvable:$true] %s39
      %45 = dma.hbm_to_vmem [thread:$0]  %s5, 1024, %s40, [#allocation5], 64, 64, 4
    $region25: #{forward.1} parent=1 // pred_fallthru
      _
    // Predicated region
    $region26: #{forward.1} parent=1 // pred_check
      _
    $region27: #{forward.1} parent=1 // pred_check_branch
      %47 = sbr.rel (0) target = $region29
    $region28: #{forward.1} parent=1 // pred_region
      _
    $region29: #{forward.1} parent=1 // pred_fallthru
      _
    // Predicated region
    $region30: #{forward.1} parent=1 // pred_check
      _
    $region31: #{forward.1} parent=1 // pred_check_branch
      %49 = sbr.rel (0) target = $region33
    $region32: #{forward.1} parent=1 // pred_region
      %50 = dma.done [#allocation3], 1024
    $region33: #{forward.1} parent=1 // pred_fallthru
      _
    // Predicated region
    $region34: #{forward.1} parent=1 // pred_check
      _
    $region35: #{forward.1} parent=1 // pred_check_branch
      %52 = sbr.rel (0) target = $region37
    $region36: #{forward.1} parent=1 // pred_region
      %53 = dma.done [#allocation5], 1024
    $region37: #{forward.1} parent=1 // pred_fallthru
      _
    %v55 = vld [vmem:[%s0] sm:$0xf]
    %v56 = vld [vmem:[%s0 + $0x4] sm:$0xf]
    %v57 = vld [vmem:[%s0 + $0x8] sm:$0xf]
    %v58 = vld [vmem:[%s0 + $0xc] sm:$0xf]
    %v59 = vld [vmem:[%s0 + $0x10] sm:$0xf]
    %v60 = vld [vmem:[%s0 + $0x14] sm:$0xf]
    %v61 = vld [vmem:[%s0 + $0x18] sm:$0xf]
    %v62 = vld [vmem:[%s0 + $0x1c] sm:$0xf]
    %v63 = vld [vmem:[%s0 + $0x20] sm:$0xf]
    %v64 = vld [vmem:[%s0 + $0x24] sm:$0xf]
    %v65 = vld [vmem:[%s0 + $0x28] sm:$0xf]
    %v66 = vld [vmem:[%s0 + $0x2c] sm:$0xf]
    %v67 = vld [vmem:[%s0 + $0x30] sm:$0xf]
    %v68 = vld [vmem:[%s0 + $0x34] sm:$0xf]
    %v69 = vld [vmem:[%s0 + $0x38] sm:$0xf]
    %v70 = vld [vmem:[%s0 + $0x3c] sm:$0xf]
    %v71 = vld [vmem:[%s1] sm:$0xf]
    %v72 = vld [vmem:[%s1 + $0x4] sm:$0xf]
    %v73 = vld [vmem:[%s1 + $0x8] sm:$0xf]
    %v74 = vld [vmem:[%s1 + $0xc] sm:$0xf]
    %v75 = vld [vmem:[%s1 + $0x10] sm:$0xf]
    %v76 = vld [vmem:[%s1 + $0x14] sm:$0xf]
    %v77 = vld [vmem:[%s1 + $0x18] sm:$0xf]
    %v78 = vld [vmem:[%s1 + $0x1c] sm:$0xf]
    %v79 = vld [vmem:[%s1 + $0x20] sm:$0xf]
    %v80 = vld [vmem:[%s1 + $0x24] sm:$0xf]
    %v81 = vld [vmem:[%s1 + $0x28] sm:$0xf]
    %v82 = vld [vmem:[%s1 + $0x2c] sm:$0xf]
    %v83 = vld [vmem:[%s1 + $0x30] sm:$0xf]
    %v84 = vld [vmem:[%s1 + $0x34] sm:$0xf]
    %v85 = vld [vmem:[%s1 + $0x38] sm:$0xf]
    %v86 = vld [vmem:[%s1 + $0x3c] sm:$0xf]
    %v87 = vld [vmem:[%s2] sm:$0xf]
    %v88 = vlaneseq
    %v89 = vshrl.u32 %v88, 7
    %v90 = vsub.s32 0, %v89
    %v91 = vrot.slane %v87, %v90
    %v108 = vunpack.c.l.b16 %v55
    %v109 = vunpack.c.l.b16 %v56
    %v110 = vunpack.c.l.b16 %v57
    %v111 = vunpack.c.l.b16 %v58
    %v112 = vunpack.c.l.b16 %v59
    %v113 = vunpack.c.l.b16 %v60
    %v114 = vunpack.c.l.b16 %v61
    %v115 = vunpack.c.l.b16 %v62
    %v116 = vunpack.c.l.b16 %v63
    %v117 = vunpack.c.l.b16 %v64
    %v118 = vunpack.c.l.b16 %v65
    %v119 = vunpack.c.l.b16 %v66
    %v120 = vunpack.c.l.b16 %v67
    %v121 = vunpack.c.l.b16 %v68
    %v122 = vunpack.c.l.b16 %v69
    %v123 = vunpack.c.l.b16 %v70
    %v124 = vpack.c.b16 %v109, %v108
    %v125 = vpack.c.b16 %v111, %v110
    %v126 = vpack.c.b16 %v113, %v112
    %v127 = vpack.c.b16 %v115, %v114
    %v128 = vpack.c.b16 %v117, %v116
    %v129 = vpack.c.b16 %v119, %v118
    %v130 = vpack.c.b16 %v121, %v120
    %v131 = vpack.c.b16 %v123, %v122
    %v156 = vunpack.c.l.b16 %v71
    %v157 = vunpack.c.l.b16 %v72
    %v158 = vunpack.c.l.b16 %v73
    %v159 = vunpack.c.l.b16 %v74
    %v160 = vunpack.c.l.b16 %v75
    %v161 = vunpack.c.l.b16 %v76
    %v162 = vunpack.c.l.b16 %v77
    %v163 = vunpack.c.l.b16 %v78
    %v164 = vunpack.c.l.b16 %v79
    %v165 = vunpack.c.l.b16 %v80
    %v166 = vunpack.c.l.b16 %v81
    %v167 = vunpack.c.l.b16 %v82
    %v168 = vunpack.c.l.b16 %v83
    %v169 = vunpack.c.l.b16 %v84
    %v170 = vunpack.c.l.b16 %v85
    %v171 = vunpack.c.l.b16 %v86
    %v172 = vpack.c.b16 %v157, %v156
    %v173 = vpack.c.b16 %v159, %v158
    %v174 = vpack.c.b16 %v161, %v160
    %v175 = vpack.c.b16 %v163, %v162
    %v176 = vpack.c.b16 %v165, %v164
    %v177 = vpack.c.b16 %v167, %v166
    %v178 = vpack.c.b16 %v169, %v168
    %v179 = vpack.c.b16 %v171, %v170
    %188 = vmatprep.subr.bf16.mxu0 0
    %189 = vmatpush1.bf16.msra.mxu0 %v172
    %190 = vmatprep.subr.bf16.mxu0 0
    %191 = vmatpush1.bf16.msra.mxu0 %v173
    %192 = vmatprep.subr.bf16.mxu0 0
    %193 = vmatpush1.bf16.msra.mxu0 %v174
    %194 = vmatprep.subr.bf16.mxu0 0
    %195 = vmatpush1.bf16.msra.mxu0 %v175
    %196 = vmatprep.subr.bf16.mxu0 0
    %197 = vmatpush1.bf16.msra.mxu0 %v176
    %198 = vmatprep.subr.bf16.mxu0 0
    %199 = vmatpush1.bf16.msra.mxu0 %v177
    %200 = vmatprep.subr.bf16.mxu0 0
    %201 = vmatpush1.bf16.msra.mxu0 %v178
    %202 = vmatprep.subr.bf16.mxu0 0
    %203 = vmatpush1.bf16.msra.mxu0 %v179
    %204 = vmatprep.subr.bf16.mxu0 0
    %205 = vmatpush1.bf16.msra.mxu0 0
    %206 = vmatprep.subr.bf16.mxu0 0
    %207 = vmatpush1.bf16.msra.mxu0 0
    %208 = vmatprep.subr.bf16.mxu0 0
    %209 = vmatpush1.bf16.msra.mxu0 0
    %210 = vmatprep.subr.bf16.mxu0 0
    %211 = vmatpush1.bf16.msra.mxu0 0
    %212 = vmatprep.subr.bf16.mxu0 0
    %213 = vmatpush1.bf16.msra.mxu0 0
    %214 = vmatprep.subr.bf16.mxu0 0
    %215 = vmatpush1.bf16.msra.mxu0 0
    %216 = vmatprep.subr.bf16.mxu0 0
    %217 = vmatpush1.bf16.msra.mxu0 0
    %218 = vmatprep.subr.bf16.mxu0 0
    %219 = vmatpush1.bf16.msra.mxu0 0
    %220 = vmatprep.mubr.bf16.mxu0 0
    %221 = vmatmul.mubr.bf16.gmra.mrb[0].mxu0 %v124
    %v222 = vpop.f32.mrb[0].mxu0
    %v223 = vadd.f32 %v91, %v222
    %v224 = vpop.f32.mrb[0].mxu0
    %v225 = vpop.f32.mrb[0].mxu0
    %v226 = vadd.f32 %v91, %v225
    %v227 = vpop.f32.mrb[0].mxu0
    %228 = vmatprep.mubr.bf16.mxu0 0
    %229 = vmatmul.mubr.bf16.gmra.mrb[0].mxu0 %v125
    %v230 = vpop.f32.mrb[0].mxu0
    %v231 = vadd.f32 %v91, %v230
    %v232 = vpop.f32.mrb[0].mxu0
    %v233 = vpop.f32.mrb[0].mxu0
    %v234 = vadd.f32 %v91, %v233
    %v235 = vpop.f32.mrb[0].mxu0
    %236 = vmatprep.mubr.bf16.mxu0 0
    %237 = vmatmul.mubr.bf16.gmra.mrb[0].mxu0 %v126
    %v238 = vpop.f32.mrb[0].mxu0
    %v239 = vadd.f32 %v91, %v238
    %v240 = vpop.f32.mrb[0].mxu0
    %v241 = vpop.f32.mrb[0].mxu0
    %v242 = vadd.f32 %v91, %v241
    %v243 = vpop.f32.mrb[0].mxu0
    %244 = vmatprep.mubr.bf16.mxu0 0
    %245 = vmatmul.mubr.bf16.gmra.mrb[0].mxu0 %v127
    %v246 = vpop.f32.mrb[0].mxu0
    %v247 = vadd.f32 %v91, %v246
    %v248 = vpop.f32.mrb[0].mxu0
    %v249 = vpop.f32.mrb[0].mxu0
    %v250 = vadd.f32 %v91, %v249
    %v251 = vpop.f32.mrb[0].mxu0
    %252 = vmatprep.mubr.bf16.mxu0 0
    %253 = vmatmul.mubr.bf16.gmra.mrb[0].mxu0 %v128
    %v254 = vpop.f32.mrb[0].mxu0
    %v255 = vadd.f32 %v91, %v254
    %v256 = vpop.f32.mrb[0].mxu0
    %v257 = vpop.f32.mrb[0].mxu0
    %v258 = vadd.f32 %v91, %v257
    %v259 = vpop.f32.mrb[0].mxu0
    %260 = vmatprep.mubr.bf16.mxu0 0
    %261 = vmatmul.mubr.bf16.gmra.mrb[0].mxu0 %v129
    %v262 = vpop.f32.mrb[0].mxu0
    %v263 = vadd.f32 %v91, %v262
    %v264 = vpop.f32.mrb[0].mxu0
    %v265 = vpop.f32.mrb[0].mxu0
    %v266 = vadd.f32 %v91, %v265
    %v267 = vpop.f32.mrb[0].mxu0
    %268 = vmatprep.mubr.bf16.mxu0 0
    %269 = vmatmul.mubr.bf16.gmra.mrb[0].mxu0 %v130
    %v270 = vpop.f32.mrb[0].mxu0
    %v271 = vadd.f32 %v91, %v270
    %v272 = vpop.f32.mrb[0].mxu0
    %v273 = vpop.f32.mrb[0].mxu0
    %v274 = vadd.f32 %v91, %v273
    %v275 = vpop.f32.mrb[0].mxu0
    %276 = vmatprep.mubr.bf16.mxu0 0
    %277 = vmatmul.mubr.bf16.gmra.mrb[0].mxu0 %v131
    %v278 = vpop.f32.mrb[0].mxu0
    %v279 = vadd.f32 %v91, %v278
    %v280 = vpop.f32.mrb[0].mxu0
    %v281 = vpop.f32.mrb[0].mxu0
    %v282 = vadd.f32 %v91, %v281
    %v283 = vpop.f32.mrb[0].mxu0
    %284 = vdwg.mxu0
    %v285 = vlaneseq
    %v286 = vshrl.u32 %v285, 7
    %v287 = vsub.s32 3, %v286
    %v288 = vrot.slane %v87, %v287
    %v289 = vmul.f32 %v223, %v288
    %v290 = vmul.f32 %v226, %v288
    %v291 = vmul.f32 %v231, %v288
    %v292 = vmul.f32 %v234, %v288
    %v293 = vmul.f32 %v239, %v288
    %v294 = vmul.f32 %v242, %v288
    %v295 = vmul.f32 %v247, %v288
    %v296 = vmul.f32 %v250, %v288
    %v297 = vmul.f32 %v255, %v288
    %v298 = vmul.f32 %v258, %v288
    %v299 = vmul.f32 %v263, %v288
    %v300 = vmul.f32 %v266, %v288
    %v301 = vmul.f32 %v271, %v288
    %v302 = vmul.f32 %v274, %v288
    %v303 = vmul.f32 %v279, %v288
    %v304 = vmul.f32 %v282, %v288
    %305 = vadd.xlane.f32.xlu0 %v289
    %v306 = vpop.xlane.xlu0 %305
    %307 = vadd.xlane.f32.xlu0 %v290
    %v308 = vpop.xlane.xlu0 %307
    %309 = vadd.xlane.f32.xlu0 %v291
    %v310 = vpop.xlane.xlu0 %309
    %311 = vadd.xlane.f32.xlu0 %v292
    %v312 = vpop.xlane.xlu0 %311
    %313 = vadd.xlane.f32.xlu0 %v293
    %v314 = vpop.xlane.xlu0 %313
    %315 = vadd.xlane.f32.xlu0 %v294
    %v316 = vpop.xlane.xlu0 %315
    %317 = vadd.xlane.f32.xlu0 %v295
    %v318 = vpop.xlane.xlu0 %317
    %319 = vadd.xlane.f32.xlu0 %v296
    %v320 = vpop.xlane.xlu0 %319
    %321 = vadd.xlane.f32.xlu0 %v297
    %v322 = vpop.xlane.xlu0 %321
    %323 = vadd.xlane.f32.xlu0 %v298
    %v324 = vpop.xlane.xlu0 %323
    %325 = vadd.xlane.f32.xlu0 %v299
    %v326 = vpop.xlane.xlu0 %325
    %327 = vadd.xlane.f32.xlu0 %v300
    %v328 = vpop.xlane.xlu0 %327
    %329 = vadd.xlane.f32.xlu0 %v301
    %v330 = vpop.xlane.xlu0 %329
    %331 = vadd.xlane.f32.xlu0 %v302
    %v332 = vpop.xlane.xlu0 %331
    %333 = vadd.xlane.f32.xlu0 %v303
    %v334 = vpop.xlane.xlu0 %333
    %335 = vadd.xlane.f32.xlu0 %v304
    %v336 = vpop.xlane.xlu0 %335
    %v337 = vmul.f32 %v306, 0.015625
    %v338 = vmul.f32 %v308, 0.015625
    %v339 = vmul.f32 %v310, 0.015625
    %v340 = vmul.f32 %v312, 0.015625
    %v341 = vmul.f32 %v314, 0.015625
    %v342 = vmul.f32 %v316, 0.015625
    %v343 = vmul.f32 %v318, 0.015625
    %v344 = vmul.f32 %v320, 0.015625
    %v345 = vmul.f32 %v322, 0.015625
    %v346 = vmul.f32 %v324, 0.015625
    %v347 = vmul.f32 %v326, 0.015625
    %v348 = vmul.f32 %v328, 0.015625
    %v349 = vmul.f32 %v330, 0.015625
    %v350 = vmul.f32 %v332, 0.015625
    %v351 = vmul.f32 %v334, 0.015625
    %v352 = vmul.f32 %v336, 0.015625
    %v353 = vsub.f32 %v289, %v337
    %v354 = vsub.f32 %v290, %v338
    %v355 = vsub.f32 %v291, %v339
    %v356 = vsub.f32 %v292, %v340
    %v357 = vsub.f32 %v293, %v341
    %v358 = vsub.f32 %v294, %v342
    %v359 = vsub.f32 %v295, %v343
    %v360 = vsub.f32 %v296, %v344
    %v361 = vsub.f32 %v297, %v345
    %v362 = vsub.f32 %v298, %v346
    %v363 = vsub.f32 %v299, %v347
    %v364 = vsub.f32 %v300, %v348
    %v365 = vsub.f32 %v301, %v349
    %v366 = vsub.f32 %v302, %v350
    %v367 = vsub.f32 %v303, %v351
    %v368 = vsub.f32 %v304, %v352
    %v369 = vmul.f32 %v353, %v288
    %v370 = vmul.f32 %v354, %v288
    %v371 = vmul.f32 %v355, %v288
    %v372 = vmul.f32 %v356, %v288
    %v373 = vmul.f32 %v357, %v288
    %v374 = vmul.f32 %v358, %v288
    %v375 = vmul.f32 %v359, %v288
    %v376 = vmul.f32 %v360, %v288
    %v377 = vmul.f32 %v361, %v288
    %v378 = vmul.f32 %v362, %v288
    %v379 = vmul.f32 %v363, %v288
    %v380 = vmul.f32 %v364, %v288
    %v381 = vmul.f32 %v365, %v288
    %v382 = vmul.f32 %v366, %v288
    %v383 = vmul.f32 %v367, %v288
    %v384 = vmul.f32 %v368, %v288
    %v385 = vmul.f32 %v369, %v369
    %v386 = vmul.f32 %v370, %v370
    %v387 = vmul.f32 %v371, %v371
    %v388 = vmul.f32 %v372, %v372
    %v389 = vmul.f32 %v373, %v373
    %v390 = vmul.f32 %v374, %v374
    %v391 = vmul.f32 %v375, %v375
    %v392 = vmul.f32 %v376, %v376
    %v393 = vmul.f32 %v377, %v377
    %v394 = vmul.f32 %v378, %v378
    %v395 = vmul.f32 %v379, %v379
    %v396 = vmul.f32 %v380, %v380
    %v397 = vmul.f32 %v381, %v381
    %v398 = vmul.f32 %v382, %v382
    %v399 = vmul.f32 %v383, %v383
    %v400 = vmul.f32 %v384, %v384
    %401 = vadd.xlane.f32.xlu0 %v385
    %v402 = vpop.xlane.xlu0 %401
    %403 = vadd.xlane.f32.xlu0 %v386
    %v404 = vpop.xlane.xlu0 %403
    %405 = vadd.xlane.f32.xlu0 %v387
    %v406 = vpop.xlane.xlu0 %405
    %407 = vadd.xlane.f32.xlu0 %v388
    %v408 = vpop.xlane.xlu0 %407
    %409 = vadd.xlane.f32.xlu0 %v389
    %v410 = vpop.xlane.xlu0 %409
    %411 = vadd.xlane.f32.xlu0 %v390
    %v412 = vpop.xlane.xlu0 %411
    %413 = vadd.xlane.f32.xlu0 %v391
    %v414 = vpop.xlane.xlu0 %413
    %415 = vadd.xlane.f32.xlu0 %v392
    %v416 = vpop.xlane.xlu0 %415
    %417 = vadd.xlane.f32.xlu0 %v393
    %v418 = vpop.xlane.xlu0 %417
    %419 = vadd.xlane.f32.xlu0 %v394
    %v420 = vpop.xlane.xlu0 %419
    %421 = vadd.xlane.f32.xlu0 %v395
    %v422 = vpop.xlane.xlu0 %421
    %423 = vadd.xlane.f32.xlu0 %v396
    %v424 = vpop.xlane.xlu0 %423
    %425 = vadd.xlane.f32.xlu0 %v397
    %v426 = vpop.xlane.xlu0 %425
    %427 = vadd.xlane.f32.xlu0 %v398
    %v428 = vpop.xlane.xlu0 %427
    %429 = vadd.xlane.f32.xlu0 %v399
    %v430 = vpop.xlane.xlu0 %429
    %431 = vadd.xlane.f32.xlu0 %v400
    %v432 = vpop.xlane.xlu0 %431
    %v433 = vmul.f32 %v402, 0.015625
    %v434 = vmul.f32 %v404, 0.015625
    %v435 = vmul.f32 %v406, 0.015625
    %v436 = vmul.f32 %v408, 0.015625
    %v437 = vmul.f32 %v410, 0.015625
    %v438 = vmul.f32 %v412, 0.015625
    %v439 = vmul.f32 %v414, 0.015625
    %v440 = vmul.f32 %v416, 0.015625
    %v441 = vmul.f32 %v418, 0.015625
    %v442 = vmul.f32 %v420, 0.015625
    %v443 = vmul.f32 %v422, 0.015625
    %v444 = vmul.f32 %v424, 0.015625
    %v445 = vmul.f32 %v426, 0.015625
    %v446 = vmul.f32 %v428, 0.015625
    %v447 = vmul.f32 %v430, 0.015625
    %v448 = vmul.f32 %v432, 0.015625
    %v449 = vadd.f32 %v433, 1e-05
    %v450 = vadd.f32 %v434, 1e-05
    %v451 = vadd.f32 %v435, 1e-05
    %v452 = vadd.f32 %v436, 1e-05
    %v453 = vadd.f32 %v437, 1e-05
    %v454 = vadd.f32 %v438, 1e-05
    %v455 = vadd.f32 %v439, 1e-05
    %v456 = vadd.f32 %v440, 1e-05
    %v457 = vadd.f32 %v441, 1e-05
    %v458 = vadd.f32 %v442, 1e-05
    %v459 = vadd.f32 %v443, 1e-05
    %v460 = vadd.f32 %v444, 1e-05
    %v461 = vadd.f32 %v445, 1e-05
    %v462 = vadd.f32 %v446, 1e-05
    %v463 = vadd.f32 %v447, 1e-05
    %v464 = vadd.f32 %v448, 1e-05
    %v465 = vrsqrt.pop %v449
    %v466 = vrsqrt.pop %v450
    %v467 = vrsqrt.pop %v451
    %v468 = vrsqrt.pop %v452
    %v469 = vrsqrt.pop %v453
    %v470 = vrsqrt.pop %v454
    %v471 = vrsqrt.pop %v455
    %v472 = vrsqrt.pop %v456
    %v473 = vrsqrt.pop %v457
    %v474 = vrsqrt.pop %v458
    %v475 = vrsqrt.pop %v459
    %v476 = vrsqrt.pop %v460
    %v477 = vrsqrt.pop %v461
    %v478 = vrsqrt.pop %v462
    %v479 = vrsqrt.pop %v463
    %v480 = vrsqrt.pop %v464
    %v481 = vmul.f32 %v369, %v465
    %v482 = vmul.f32 %v370, %v466
    %v483 = vmul.f32 %v371, %v467
    %v484 = vmul.f32 %v372, %v468
    %v485 = vmul.f32 %v373, %v469
    %v486 = vmul.f32 %v374, %v470
    %v487 = vmul.f32 %v375, %v471
    %v488 = vmul.f32 %v376, %v472
    %v489 = vmul.f32 %v377, %v473
    %v490 = vmul.f32 %v378, %v474
    %v491 = vmul.f32 %v379, %v475
    %v492 = vmul.f32 %v380, %v476
    %v493 = vmul.f32 %v381, %v477
    %v494 = vmul.f32 %v382, %v478
    %v495 = vmul.f32 %v383, %v479
    %v496 = vmul.f32 %v384, %v480
    %v497 = vlaneseq
    %v498 = vshrl.u32 %v497, 7
    %v499 = vsub.s32 1, %v498
    %v500 = vrot.slane %v87, %v499
    %v501 = vmul.f32 %v481, %v500
    %v502 = vmul.f32 %v482, %v500
    %v503 = vmul.f32 %v483, %v500
    %v504 = vmul.f32 %v484, %v500
    %v505 = vmul.f32 %v485, %v500
    %v506 = vmul.f32 %v486, %v500
    %v507 = vmul.f32 %v487, %v500
    %v508 = vmul.f32 %v488, %v500
    %v509 = vmul.f32 %v489, %v500
    %v510 = vmul.f32 %v490, %v500
    %v511 = vmul.f32 %v491, %v500
    %v512 = vmul.f32 %v492, %v500
    %v513 = vmul.f32 %v493, %v500
    %v514 = vmul.f32 %v494, %v500
    %v515 = vmul.f32 %v495, %v500
    %v516 = vmul.f32 %v496, %v500
    %v517 = vlaneseq
    %v518 = vshrl.u32 %v517, 7
    %v519 = vsub.s32 2, %v518
    %v520 = vrot.slane %v87, %v519
    %v521 = vadd.f32 %v501, %v520
    %v522 = vadd.f32 %v502, %v520
    %v523 = vadd.f32 %v503, %v520
    %v524 = vadd.f32 %v504, %v520
    %v525 = vadd.f32 %v505, %v520
    %v526 = vadd.f32 %v506, %v520
    %v527 = vadd.f32 %v507, %v520
    %v528 = vadd.f32 %v508, %v520
    %v529 = vadd.f32 %v509, %v520
    %v530 = vadd.f32 %v510, %v520
    %v531 = vadd.f32 %v511, %v520
    %v532 = vadd.f32 %v512, %v520
    %v533 = vadd.f32 %v513, %v520
    %v534 = vadd.f32 %v514, %v520
    %v535 = vadd.f32 %v515, %v520
    %v536 = vadd.f32 %v516, %v520
    %v537 = vmax.f32 %v521, 0.0
    %v538 = vmax.f32 %v522, 0.0
    %v539 = vmax.f32 %v523, 0.0
    %v540 = vmax.f32 %v524, 0.0
    %v541 = vmax.f32 %v525, 0.0
    %v542 = vmax.f32 %v526, 0.0
    %v543 = vmax.f32 %v527, 0.0
    %v544 = vmax.f32 %v528, 0.0
    %v545 = vmax.f32 %v529, 0.0
    %v546 = vmax.f32 %v530, 0.0
    %v547 = vmax.f32 %v531, 0.0
    %v548 = vmax.f32 %v532, 0.0
    %v549 = vmax.f32 %v533, 0.0
    %v550 = vmax.f32 %v534, 0.0
    %v551 = vmax.f32 %v535, 0.0
    %v552 = vmax.f32 %v536, 0.0
    %v553 = vmul.f32 %v537, %v288
    %v554 = vmul.f32 %v538, %v288
    %v555 = vmul.f32 %v539, %v288
    %v556 = vmul.f32 %v540, %v288
    %v557 = vmul.f32 %v541, %v288
    %v558 = vmul.f32 %v542, %v288
    %v559 = vmul.f32 %v543, %v288
    %v560 = vmul.f32 %v544, %v288
    %v561 = vmul.f32 %v545, %v288
    %v562 = vmul.f32 %v546, %v288
    %v563 = vmul.f32 %v547, %v288
    %v564 = vmul.f32 %v548, %v288
    %v565 = vmul.f32 %v549, %v288
    %v566 = vmul.f32 %v550, %v288
    %v567 = vmul.f32 %v551, %v288
    %v568 = vmul.f32 %v552, %v288
    %v569 = vpack.c.bf16 %v554, %v553
    %v570 = vpack.c.bf16 %v556, %v555
    %v571 = vpack.c.bf16 %v558, %v557
    %v572 = vpack.c.bf16 %v560, %v559
    %v573 = vpack.c.bf16 %v562, %v561
    %v574 = vpack.c.bf16 %v564, %v563
    %v575 = vpack.c.bf16 %v566, %v565
    %v576 = vpack.c.bf16 %v568, %v567
    %v577 = vld [vmem:[#allocation2] sm:$0xf]
    %v578 = vld [vmem:[#allocation2 + $0x4] sm:$0xf]
    %v579 = vld [vmem:[#allocation2 + $0x8] sm:$0xf]
    %v580 = vld [vmem:[#allocation2 + $0xc] sm:$0xf]
    %v581 = vld [vmem:[#allocation2 + $0x10] sm:$0xf]
    %v582 = vld [vmem:[#allocation2 + $0x14] sm:$0xf]
    %v583 = vld [vmem:[#allocation2 + $0x18] sm:$0xf]
    %v584 = vld [vmem:[#allocation2 + $0x1c] sm:$0xf]
    %v585 = vld [vmem:[#allocation2 + $0x20] sm:$0xf]
    %v586 = vld [vmem:[#allocation2 + $0x24] sm:$0xf]
    %v587 = vld [vmem:[#allocation2 + $0x28] sm:$0xf]
    %v588 = vld [vmem:[#allocation2 + $0x2c] sm:$0xf]
    %v589 = vld [vmem:[#allocation2 + $0x30] sm:$0xf]
    %v590 = vld [vmem:[#allocation2 + $0x34] sm:$0xf]
    %v591 = vld [vmem:[#allocation2 + $0x38] sm:$0xf]
    %v592 = vld [vmem:[#allocation2 + $0x3c] sm:$0xf]
    %v593 = vld [vmem:[%s4] sm:$0xf]
    %v594 = vlaneseq
    %v595 = vshrl.u32 %v594, 7
    %v596 = vsub.s32 0, %v595
    %v597 = vrot.slane %v593, %v596
    %v614 = vunpack.c.l.b16 %v577
    %v615 = vunpack.c.l.b16 %v578
    %v616 = vunpack.c.l.b16 %v579
    %v617 = vunpack.c.l.b16 %v580
    %v618 = vunpack.c.l.b16 %v581
    %v619 = vunpack.c.l.b16 %v582
    %v620 = vunpack.c.l.b16 %v583
    %v621 = vunpack.c.l.b16 %v584
    %v622 = vunpack.c.l.b16 %v585
    %v623 = vunpack.c.l.b16 %v586
    %v624 = vunpack.c.l.b16 %v587
    %v625 = vunpack.c.l.b16 %v588
    %v626 = vunpack.c.l.b16 %v589
    %v627 = vunpack.c.l.b16 %v590
    %v628 = vunpack.c.l.b16 %v591
    %v629 = vunpack.c.l.b16 %v592
    %v630 = vpack.c.b16 %v615, %v614
    %v631 = vpack.c.b16 %v617, %v616
    %v632 = vpack.c.b16 %v619, %v618
    %v633 = vpack.c.b16 %v621, %v620
    %v634 = vpack.c.b16 %v623, %v622
    %v635 = vpack.c.b16 %v625, %v624
    %v636 = vpack.c.b16 %v627, %v626
    %v637 = vpack.c.b16 %v629, %v628
    %646 = vmatprep.subr.bf16.mxu0 0
    %647 = vmatpush1.bf16.msra.mxu0 %v630
    %648 = vmatprep.subr.bf16.mxu0 0
    %649 = vmatpush1.bf16.msra.mxu0 %v631
    %650 = vmatprep.subr.bf16.mxu0 0
    %651 = vmatpush1.bf16.msra.mxu0 %v632
    %652 = vmatprep.subr.bf16.mxu0 0
    %653 = vmatpush1.bf16.msra.mxu0 %v633
    %654 = vmatprep.subr.bf16.mxu0 0
    %655 = vmatpush1.bf16.msra.mxu0 %v634
    %656 = vmatprep.subr.bf16.mxu0 0
    %657 = vmatpush1.bf16.msra.mxu0 %v635
    %658 = vmatprep.subr.bf16.mxu0 0
    %659 = vmatpush1.bf16.msra.mxu0 %v636
    %660 = vmatprep.subr.bf16.mxu0 0
    %661 = vmatpush1.bf16.msra.mxu0 %v637
    %662 = vmatprep.subr.bf16.mxu0 0
    %663 = vmatpush1.bf16.msra.mxu0 0
    %664 = vmatprep.subr.bf16.mxu0 0
    %665 = vmatpush1.bf16.msra.mxu0 0
    %666 = vmatprep.subr.bf16.mxu0 0
    %667 = vmatpush1.bf16.msra.mxu0 0
    %668 = vmatprep.subr.bf16.mxu0 0
    %669 = vmatpush1.bf16.msra.mxu0 0
    %670 = vmatprep.subr.bf16.mxu0 0
    %671 = vmatpush1.bf16.msra.mxu0 0
    %672 = vmatprep.subr.bf16.mxu0 0
    %673 = vmatpush1.bf16.msra.mxu0 0
    %674 = vmatprep.subr.bf16.mxu0 0
    %675 = vmatpush1.bf16.msra.mxu0 0
    %676 = vmatprep.subr.bf16.mxu0 0
    %677 = vmatpush1.bf16.msra.mxu0 0
    %678 = vmatprep.mubr.bf16.mxu0 0
    %679 = vmatmul.mubr.bf16.gmra.mrb[0].mxu0 %v569
    %v680 = vpop.f32.mrb[0].mxu0
    %v681 = vadd.f32 %v597, %v680
    %v682 = vpop.f32.mrb[0].mxu0
    %v683 = vpop.f32.mrb[0].mxu0
    %v684 = vadd.f32 %v597, %v683
    %v685 = vpop.f32.mrb[0].mxu0
    %686 = vmatprep.mubr.bf16.mxu0 0
    %687 = vmatmul.mubr.bf16.gmra.mrb[0].mxu0 %v570
    %v688 = vpop.f32.mrb[0].mxu0
    %v689 = vadd.f32 %v597, %v688
    %v690 = vpop.f32.mrb[0].mxu0
    %v691 = vpop.f32.mrb[0].mxu0
    %v692 = vadd.f32 %v597, %v691
    %v693 = vpop.f32.mrb[0].mxu0
    %694 = vmatprep.mubr.bf16.mxu0 0
    %695 = vmatmul.mubr.bf16.gmra.mrb[0].mxu0 %v571
    %v696 = vpop.f32.mrb[0].mxu0
    %v697 = vadd.f32 %v597, %v696
    %v698 = vpop.f32.mrb[0].mxu0
    %v699 = vpop.f32.mrb[0].mxu0
    %v700 = vadd.f32 %v597, %v699
    %v701 = vpop.f32.mrb[0].mxu0
    %702 = vmatprep.mubr.bf16.mxu0 0
    %703 = vmatmul.mubr.bf16.gmra.mrb[0].mxu0 %v572
    %v704 = vpop.f32.mrb[0].mxu0
    %v705 = vadd.f32 %v597, %v704
    %v706 = vpop.f32.mrb[0].mxu0
    %v707 = vpop.f32.mrb[0].mxu0
    %v708 = vadd.f32 %v597, %v707
    %v709 = vpop.f32.mrb[0].mxu0
    %710 = vmatprep.mubr.bf16.mxu0 0
    %711 = vmatmul.mubr.bf16.gmra.mrb[0].mxu0 %v573
    %v712 = vpop.f32.mrb[0].mxu0
    %v713 = vadd.f32 %v597, %v712
    %v714 = vpop.f32.mrb[0].mxu0
    %v715 = vpop.f32.mrb[0].mxu0
    %v716 = vadd.f32 %v597, %v715
    %v717 = vpop.f32.mrb[0].mxu0
    %718 = vmatprep.mubr.bf16.mxu0 0
    %719 = vmatmul.mubr.bf16.gmra.mrb[0].mxu0 %v574
    %v720 = vpop.f32.mrb[0].mxu0
    %v721 = vadd.f32 %v597, %v720
    %v722 = vpop.f32.mrb[0].mxu0
    %v723 = vpop.f32.mrb[0].mxu0
    %v724 = vadd.f32 %v597, %v723
    %v725 = vpop.f32.mrb[0].mxu0
    %726 = vmatprep.mubr.bf16.mxu0 0
    %727 = vmatmul.mubr.bf16.gmra.mrb[0].mxu0 %v575
    %v728 = vpop.f32.mrb[0].mxu0
    %v729 = vadd.f32 %v597, %v728
    %v730 = vpop.f32.mrb[0].mxu0
    %v731 = vpop.f32.mrb[0].mxu0
    %v732 = vadd.f32 %v597, %v731
    %v733 = vpop.f32.mrb[0].mxu0
    %734 = vmatprep.mubr.bf16.mxu0 0
    %735 = vmatmul.mubr.bf16.gmra.mrb[0].mxu0 %v576
    %v736 = vpop.f32.mrb[0].mxu0
    %v737 = vadd.f32 %v597, %v736
    %v738 = vpop.f32.mrb[0].mxu0
    %v739 = vpop.f32.mrb[0].mxu0
    %v740 = vadd.f32 %v597, %v739
    %v741 = vpop.f32.mrb[0].mxu0
    %742 = vdwg.mxu0
    %v743 = vlaneseq
    %v744 = vshrl.u32 %v743, 7
    %v745 = vsub.s32 3, %v744
    %v746 = vrot.slane %v593, %v745
    %v747 = vmul.f32 %v681, %v746
    %v748 = vmul.f32 %v684, %v746
    %v749 = vmul.f32 %v689, %v746
    %v750 = vmul.f32 %v692, %v746
    %v751 = vmul.f32 %v697, %v746
    %v752 = vmul.f32 %v700, %v746
    %v753 = vmul.f32 %v705, %v746
    %v754 = vmul.f32 %v708, %v746
    %v755 = vmul.f32 %v713, %v746
    %v756 = vmul.f32 %v716, %v746
    %v757 = vmul.f32 %v721, %v746
    %v758 = vmul.f32 %v724, %v746
    %v759 = vmul.f32 %v729, %v746
    %v760 = vmul.f32 %v732, %v746
    %v761 = vmul.f32 %v737, %v746
    %v762 = vmul.f32 %v740, %v746
    %763 = vadd.xlane.f32.xlu0 %v747
    %v764 = vpop.xlane.xlu0 %763
    %765 = vadd.xlane.f32.xlu0 %v748
    %v766 = vpop.xlane.xlu0 %765
    %767 = vadd.xlane.f32.xlu0 %v749
    %v768 = vpop.xlane.xlu0 %767
    %769 = vadd.xlane.f32.xlu0 %v750
    %v770 = vpop.xlane.xlu0 %769
    %771 = vadd.xlane.f32.xlu0 %v751
    %v772 = vpop.xlane.xlu0 %771
    %773 = vadd.xlane.f32.xlu0 %v752
    %v774 = vpop.xlane.xlu0 %773
    %775 = vadd.xlane.f32.xlu0 %v753
    %v776 = vpop.xlane.xlu0 %775
    %777 = vadd.xlane.f32.xlu0 %v754
    %v778 = vpop.xlane.xlu0 %777
    %779 = vadd.xlane.f32.xlu0 %v755
    %v780 = vpop.xlane.xlu0 %779
    %781 = vadd.xlane.f32.xlu0 %v756
    %v782 = vpop.xlane.xlu0 %781
    %783 = vadd.xlane.f32.xlu0 %v757
    %v784 = vpop.xlane.xlu0 %783
    %785 = vadd.xlane.f32.xlu0 %v758
    %v786 = vpop.xlane.xlu0 %785
    %787 = vadd.xlane.f32.xlu0 %v759
    %v788 = vpop.xlane.xlu0 %787
    %789 = vadd.xlane.f32.xlu0 %v760
    %v790 = vpop.xlane.xlu0 %789
    %791 = vadd.xlane.f32.xlu0 %v761
    %v792 = vpop.xlane.xlu0 %791
    %793 = vadd.xlane.f32.xlu0 %v762
    %v794 = vpop.xlane.xlu0 %793
    %v795 = vmul.f32 %v764, 0.03125
    %v796 = vmul.f32 %v766, 0.03125
    %v797 = vmul.f32 %v768, 0.03125
    %v798 = vmul.f32 %v770, 0.03125
    %v799 = vmul.f32 %v772, 0.03125
    %v800 = vmul.f32 %v774, 0.03125
    %v801 = vmul.f32 %v776, 0.03125
    %v802 = vmul.f32 %v778, 0.03125
    %v803 = vmul.f32 %v780, 0.03125
    %v804 = vmul.f32 %v782, 0.03125
    %v805 = vmul.f32 %v784, 0.03125
    %v806 = vmul.f32 %v786, 0.03125
    %v807 = vmul.f32 %v788, 0.03125
    %v808 = vmul.f32 %v790, 0.03125
    %v809 = vmul.f32 %v792, 0.03125
    %v810 = vmul.f32 %v794, 0.03125
    %v811 = vsub.f32 %v747, %v795
    %v812 = vsub.f32 %v748, %v796
    %v813 = vsub.f32 %v749, %v797
    %v814 = vsub.f32 %v750, %v798
    %v815 = vsub.f32 %v751, %v799
    %v816 = vsub.f32 %v752, %v800
    %v817 = vsub.f32 %v753, %v801
    %v818 = vsub.f32 %v754, %v802
    %v819 = vsub.f32 %v755, %v803
    %v820 = vsub.f32 %v756, %v804
    %v821 = vsub.f32 %v757, %v805
    %v822 = vsub.f32 %v758, %v806
    %v823 = vsub.f32 %v759, %v807
    %v824 = vsub.f32 %v760, %v808
    %v825 = vsub.f32 %v761, %v809
    %v826 = vsub.f32 %v762, %v810
    %v827 = vmul.f32 %v811, %v746
    %v828 = vmul.f32 %v812, %v746
    %v829 = vmul.f32 %v813, %v746
    %v830 = vmul.f32 %v814, %v746
    %v831 = vmul.f32 %v815, %v746
    %v832 = vmul.f32 %v816, %v746
    %v833 = vmul.f32 %v817, %v746
    %v834 = vmul.f32 %v818, %v746
    %v835 = vmul.f32 %v819, %v746
    %v836 = vmul.f32 %v820, %v746
    %v837 = vmul.f32 %v821, %v746
    %v838 = vmul.f32 %v822, %v746
    %v839 = vmul.f32 %v823, %v746
    %v840 = vmul.f32 %v824, %v746
    %v841 = vmul.f32 %v825, %v746
    %v842 = vmul.f32 %v826, %v746
    %v843 = vmul.f32 %v827, %v827
    %v844 = vmul.f32 %v828, %v828
    %v845 = vmul.f32 %v829, %v829
    %v846 = vmul.f32 %v830, %v830
    %v847 = vmul.f32 %v831, %v831
    %v848 = vmul.f32 %v832, %v832
    %v849 = vmul.f32 %v833, %v833
    %v850 = vmul.f32 %v834, %v834
    %v851 = vmul.f32 %v835, %v835
    %v852 = vmul.f32 %v836, %v836
    %v853 = vmul.f32 %v837, %v837
    %v854 = vmul.f32 %v838, %v838
    %v855 = vmul.f32 %v839, %v839
    %v856 = vmul.f32 %v840, %v840
    %v857 = vmul.f32 %v841, %v841
    %v858 = vmul.f32 %v842, %v842
    %859 = vadd.xlane.f32.xlu0 %v843
    %v860 = vpop.xlane.xlu0 %859
    %861 = vadd.xlane.f32.xlu0 %v844
    %v862 = vpop.xlane.xlu0 %861
    %863 = vadd.xlane.f32.xlu0 %v845
    %v864 = vpop.xlane.xlu0 %863
    %865 = vadd.xlane.f32.xlu0 %v846
    %v866 = vpop.xlane.xlu0 %865
    %867 = vadd.xlane.f32.xlu0 %v847
    %v868 = vpop.xlane.xlu0 %867
    %869 = vadd.xlane.f32.xlu0 %v848
    %v870 = vpop.xlane.xlu0 %869
    %871 = vadd.xlane.f32.xlu0 %v849
    %v872 = vpop.xlane.xlu0 %871
    %873 = vadd.xlane.f32.xlu0 %v850
    %v874 = vpop.xlane.xlu0 %873
    %875 = vadd.xlane.f32.xlu0 %v851
    %v876 = vpop.xlane.xlu0 %875
    %877 = vadd.xlane.f32.xlu0 %v852
    %v878 = vpop.xlane.xlu0 %877
    %879 = vadd.xlane.f32.xlu0 %v853
    %v880 = vpop.xlane.xlu0 %879
    %881 = vadd.xlane.f32.xlu0 %v854
    %v882 = vpop.xlane.xlu0 %881
    %883 = vadd.xlane.f32.xlu0 %v855
    %v884 = vpop.xlane.xlu0 %883
    %885 = vadd.xlane.f32.xlu0 %v856
    %v886 = vpop.xlane.xlu0 %885
    %887 = vadd.xlane.f32.xlu0 %v857
    %v888 = vpop.xlane.xlu0 %887
    %889 = vadd.xlane.f32.xlu0 %v858
    %v890 = vpop.xlane.xlu0 %889
    %v891 = vmul.f32 %v860, 0.03125
    %v892 = vmul.f32 %v862, 0.03125
    %v893 = vmul.f32 %v864, 0.03125
    %v894 = vmul.f32 %v866, 0.03125
    %v895 = vmul.f32 %v868, 0.03125
    %v896 = vmul.f32 %v870, 0.03125
    %v897 = vmul.f32 %v872, 0.03125
    %v898 = vmul.f32 %v874, 0.03125
    %v899 = vmul.f32 %v876, 0.03125
    %v900 = vmul.f32 %v878, 0.03125
    %v901 = vmul.f32 %v880, 0.03125
    %v902 = vmul.f32 %v882, 0.03125
    %v903 = vmul.f32 %v884, 0.03125
    %v904 = vmul.f32 %v886, 0.03125
    %v905 = vmul.f32 %v888, 0.03125
    %v906 = vmul.f32 %v890, 0.03125
    %v907 = vadd.f32 %v891, 1e-05
    %v908 = vadd.f32 %v892, 1e-05
    %v909 = vadd.f32 %v893, 1e-05
    %v910 = vadd.f32 %v894, 1e-05
    %v911 = vadd.f32 %v895, 1e-05
    %v912 = vadd.f32 %v896, 1e-05
    %v913 = vadd.f32 %v897, 1e-05
    %v914 = vadd.f32 %v898, 1e-05
    %v915 = vadd.f32 %v899, 1e-05
    %v916 = vadd.f32 %v900, 1e-05
    %v917 = vadd.f32 %v901, 1e-05
    %v918 = vadd.f32 %v902, 1e-05
    %v919 = vadd.f32 %v903, 1e-05
    %v920 = vadd.f32 %v904, 1e-05
    %v921 = vadd.f32 %v905, 1e-05
    %v922 = vadd.f32 %v906, 1e-05
    %v923 = vrsqrt.pop %v907
    %v924 = vrsqrt.pop %v908
    %v925 = vrsqrt.pop %v909
    %v926 = vrsqrt.pop %v910
    %v927 = vrsqrt.pop %v911
    %v928 = vrsqrt.pop %v912
    %v929 = vrsqrt.pop %v913
    %v930 = vrsqrt.pop %v914
    %v931 = vrsqrt.pop %v915
    %v932 = vrsqrt.pop %v916
    %v933 = vrsqrt.pop %v917
    %v934 = vrsqrt.pop %v918
    %v935 = vrsqrt.pop %v919
    %v936 = vrsqrt.pop %v920
    %v937 = vrsqrt.pop %v921
    %v938 = vrsqrt.pop %v922
    %v939 = vmul.f32 %v827, %v923
    %v940 = vmul.f32 %v828, %v924
    %v941 = vmul.f32 %v829, %v925
    %v942 = vmul.f32 %v830, %v926
    %v943 = vmul.f32 %v831, %v927
    %v944 = vmul.f32 %v832, %v928
    %v945 = vmul.f32 %v833, %v929
    %v946 = vmul.f32 %v834, %v930
    %v947 = vmul.f32 %v835, %v931
    %v948 = vmul.f32 %v836, %v932
    %v949 = vmul.f32 %v837, %v933
    %v950 = vmul.f32 %v838, %v934
    %v951 = vmul.f32 %v839, %v935
    %v952 = vmul.f32 %v840, %v936
    %v953 = vmul.f32 %v841, %v937
    %v954 = vmul.f32 %v842, %v938
    %v955 = vlaneseq
    %v956 = vshrl.u32 %v955, 7
    %v957 = vsub.s32 1, %v956
    %v958 = vrot.slane %v593, %v957
    %v959 = vmul.f32 %v939, %v958
    %v960 = vmul.f32 %v940, %v958
    %v961 = vmul.f32 %v941, %v958
    %v962 = vmul.f32 %v942, %v958
    %v963 = vmul.f32 %v943, %v958
    %v964 = vmul.f32 %v944, %v958
    %v965 = vmul.f32 %v945, %v958
    %v966 = vmul.f32 %v946, %v958
    %v967 = vmul.f32 %v947, %v958
    %v968 = vmul.f32 %v948, %v958
    %v969 = vmul.f32 %v949, %v958
    %v970 = vmul.f32 %v950, %v958
    %v971 = vmul.f32 %v951, %v958
    %v972 = vmul.f32 %v952, %v958
    %v973 = vmul.f32 %v953, %v958
    %v974 = vmul.f32 %v954, %v958
    %v975 = vlaneseq
    %v976 = vshrl.u32 %v975, 7
    %v977 = vsub.s32 2, %v976
    %v978 = vrot.slane %v593, %v977
    %v979 = vadd.f32 %v959, %v978
    %v980 = vadd.f32 %v960, %v978
    %v981 = vadd.f32 %v961, %v978
    %v982 = vadd.f32 %v962, %v978
    %v983 = vadd.f32 %v963, %v978
    %v984 = vadd.f32 %v964, %v978
    %v985 = vadd.f32 %v965, %v978
    %v986 = vadd.f32 %v966, %v978
    %v987 = vadd.f32 %v967, %v978
    %v988 = vadd.f32 %v968, %v978
    %v989 = vadd.f32 %v969, %v978
    %v990 = vadd.f32 %v970, %v978
    %v991 = vadd.f32 %v971, %v978
    %v992 = vadd.f32 %v972, %v978
    %v993 = vadd.f32 %v973, %v978
    %v994 = vadd.f32 %v974, %v978
    %v995 = vmax.f32 %v979, 0.0
    %v996 = vmax.f32 %v980, 0.0
    %v997 = vmax.f32 %v981, 0.0
    %v998 = vmax.f32 %v982, 0.0
    %v999 = vmax.f32 %v983, 0.0
    %v1000 = vmax.f32 %v984, 0.0
    %v1001 = vmax.f32 %v985, 0.0
    %v1002 = vmax.f32 %v986, 0.0
    %v1003 = vmax.f32 %v987, 0.0
    %v1004 = vmax.f32 %v988, 0.0
    %v1005 = vmax.f32 %v989, 0.0
    %v1006 = vmax.f32 %v990, 0.0
    %v1007 = vmax.f32 %v991, 0.0
    %v1008 = vmax.f32 %v992, 0.0
    %v1009 = vmax.f32 %v993, 0.0
    %v1010 = vmax.f32 %v994, 0.0
    %v1011 = vmul.f32 %v995, %v746
    %v1012 = vmul.f32 %v996, %v746
    %v1013 = vmul.f32 %v997, %v746
    %v1014 = vmul.f32 %v998, %v746
    %v1015 = vmul.f32 %v999, %v746
    %v1016 = vmul.f32 %v1000, %v746
    %v1017 = vmul.f32 %v1001, %v746
    %v1018 = vmul.f32 %v1002, %v746
    %v1019 = vmul.f32 %v1003, %v746
    %v1020 = vmul.f32 %v1004, %v746
    %v1021 = vmul.f32 %v1005, %v746
    %v1022 = vmul.f32 %v1006, %v746
    %v1023 = vmul.f32 %v1007, %v746
    %v1024 = vmul.f32 %v1008, %v746
    %v1025 = vmul.f32 %v1009, %v746
    %v1026 = vmul.f32 %v1010, %v746
    %v1027 = vpack.c.bf16 %v1012, %v1011
    %v1028 = vpack.c.bf16 %v1014, %v1013
    %v1029 = vpack.c.bf16 %v1016, %v1015
    %v1030 = vpack.c.bf16 %v1018, %v1017
    %v1031 = vpack.c.bf16 %v1020, %v1019
    %v1032 = vpack.c.bf16 %v1022, %v1021
    %v1033 = vpack.c.bf16 %v1024, %v1023
    %v1034 = vpack.c.bf16 %v1026, %v1025
    %v1035 = vld [vmem:[#allocation4] sm:$0xf]
    %v1036 = vld [vmem:[#allocation4 + $0x4] sm:$0xf]
    %v1037 = vld [vmem:[#allocation4 + $0x8] sm:$0xf]
    %v1038 = vld [vmem:[#allocation4 + $0xc] sm:$0xf]
    %v1039 = vld [vmem:[#allocation4 + $0x10] sm:$0xf]
    %v1040 = vld [vmem:[#allocation4 + $0x14] sm:$0xf]
    %v1041 = vld [vmem:[#allocation4 + $0x18] sm:$0xf]
    %v1042 = vld [vmem:[#allocation4 + $0x1c] sm:$0xf]
    %v1043 = vld [vmem:[#allocation4 + $0x20] sm:$0xf]
    %v1044 = vld [vmem:[#allocation4 + $0x24] sm:$0xf]
    %v1045 = vld [vmem:[#allocation4 + $0x28] sm:$0xf]
    %v1046 = vld [vmem:[#allocation4 + $0x2c] sm:$0xf]
    %v1047 = vld [vmem:[#allocation4 + $0x30] sm:$0xf]
    %v1048 = vld [vmem:[#allocation4 + $0x34] sm:$0xf]
    %v1049 = vld [vmem:[#allocation4 + $0x38] sm:$0xf]
    %v1050 = vld [vmem:[#allocation4 + $0x3c] sm:$0xf]
    %v1051 = vld [vmem:[%s6] sm:$0x1]
    %v1053 = vlaneseq
    %v1054 = vshrl.u32 %v1053, 7
    %v1055 = vsub.s32 0, %v1054
    %v1056 = vrot.slane %v1051, %v1055
    %v1074 = vunpack.c.l.b16 %v1035
    %v1075 = vunpack.c.l.b16 %v1036
    %v1076 = vunpack.c.l.b16 %v1037
    %v1077 = vunpack.c.l.b16 %v1038
    %v1078 = vunpack.c.l.b16 %v1039
    %v1079 = vunpack.c.l.b16 %v1040
    %v1080 = vunpack.c.l.b16 %v1041
    %v1081 = vunpack.c.l.b16 %v1042
    %v1082 = vunpack.c.l.b16 %v1043
    %v1083 = vunpack.c.l.b16 %v1044
    %v1084 = vunpack.c.l.b16 %v1045
    %v1085 = vunpack.c.l.b16 %v1046
    %v1086 = vunpack.c.l.b16 %v1047
    %v1087 = vunpack.c.l.b16 %v1048
    %v1088 = vunpack.c.l.b16 %v1049
    %v1089 = vunpack.c.l.b16 %v1050
    %v1090 = vpack.c.b16 %v1075, %v1074
    %v1091 = vpack.c.b16 %v1077, %v1076
    %v1092 = vpack.c.b16 %v1079, %v1078
    %v1093 = vpack.c.b16 %v1081, %v1080
    %v1094 = vpack.c.b16 %v1083, %v1082
    %v1095 = vpack.c.b16 %v1085, %v1084
    %v1096 = vpack.c.b16 %v1087, %v1086
    %v1097 = vpack.c.b16 %v1089, %v1088
    %1106 = vmatprep.subr.bf16.mxu0 0
    %1107 = vmatpush1.bf16.msra.mxu0 %v1090
    %1108 = vmatprep.subr.bf16.mxu0 0
    %1109 = vmatpush1.bf16.msra.mxu0 %v1091
    %1110 = vmatprep.subr.bf16.mxu0 0
    %1111 = vmatpush1.bf16.msra.mxu0 %v1092
    %1112 = vmatprep.subr.bf16.mxu0 0
    %1113 = vmatpush1.bf16.msra.mxu0 %v1093
    %1114 = vmatprep.subr.bf16.mxu0 0
    %1115 = vmatpush1.bf16.msra.mxu0 %v1094
    %1116 = vmatprep.subr.bf16.mxu0 0
    %1117 = vmatpush1.bf16.msra.mxu0 %v1095
    %1118 = vmatprep.subr.bf16.mxu0 0
    %1119 = vmatpush1.bf16.msra.mxu0 %v1096
    %1120 = vmatprep.subr.bf16.mxu0 0
    %1121 = vmatpush1.bf16.msra.mxu0 %v1097
    %1122 = vmatprep.subr.bf16.mxu0 0
    %1123 = vmatpush1.bf16.msra.mxu0 0
    %1124 = vmatprep.subr.bf16.mxu0 0
    %1125 = vmatpush1.bf16.msra.mxu0 0
    %1126 = vmatprep.subr.bf16.mxu0 0
    %1127 = vmatpush1.bf16.msra.mxu0 0
    %1128 = vmatprep.subr.bf16.mxu0 0
    %1129 = vmatpush1.bf16.msra.mxu0 0
    %1130 = vmatprep.subr.bf16.mxu0 0
    %1131 = vmatpush1.bf16.msra.mxu0 0
    %1132 = vmatprep.subr.bf16.mxu0 0
    %1133 = vmatpush1.bf16.msra.mxu0 0
    %1134 = vmatprep.subr.bf16.mxu0 0
    %1135 = vmatpush1.bf16.msra.mxu0 0
    %1136 = vmatprep.subr.bf16.mxu0 0
    %1137 = vmatpush1.bf16.msra.mxu0 0
    %1138 = vmatprep.mubr.bf16.mxu0 0
    %1139 = vmatmul.mubr.bf16.gmra.mrb[0].mxu0 %v1027
    %v1140 = vpop.f32.mrb[0].mxu0
    %v1141 = vadd.f32 %v1056, %v1140
    %v1142 = vpop.f32.mrb[0].mxu0
    %v1143 = vpop.f32.mrb[0].mxu0
    %v1144 = vadd.f32 %v1056, %v1143
    %v1145 = vpop.f32.mrb[0].mxu0
    %1146 = vmatprep.mubr.bf16.mxu0 0
    %1147 = vmatmul.mubr.bf16.gmra.mrb[0].mxu0 %v1028
    %v1148 = vpop.f32.mrb[0].mxu0
    %v1149 = vadd.f32 %v1056, %v1148
    %v1150 = vpop.f32.mrb[0].mxu0
    %v1151 = vpop.f32.mrb[0].mxu0
    %v1152 = vadd.f32 %v1056, %v1151
    %v1153 = vpop.f32.mrb[0].mxu0
    %1154 = vmatprep.mubr.bf16.mxu0 0
    %1155 = vmatmul.mubr.bf16.gmra.mrb[0].mxu0 %v1029
    %v1156 = vpop.f32.mrb[0].mxu0
    %v1157 = vadd.f32 %v1056, %v1156
    %v1158 = vpop.f32.mrb[0].mxu0
    %v1159 = vpop.f32.mrb[0].mxu0
    %v1160 = vadd.f32 %v1056, %v1159
    %v1161 = vpop.f32.mrb[0].mxu0
    %1162 = vmatprep.mubr.bf16.mxu0 0
    %1163 = vmatmul.mubr.bf16.gmra.mrb[0].mxu0 %v1030
    %v1164 = vpop.f32.mrb[0].mxu0
    %v1165 = vadd.f32 %v1056, %v1164
    %v1166 = vpop.f32.mrb[0].mxu0
    %v1167 = vpop.f32.mrb[0].mxu0
    %v1168 = vadd.f32 %v1056, %v1167
    %v1169 = vpop.f32.mrb[0].mxu0
    %1170 = vmatprep.mubr.bf16.mxu0 0
    %1171 = vmatmul.mubr.bf16.gmra.mrb[0].mxu0 %v1031
    %v1172 = vpop.f32.mrb[0].mxu0
    %v1173 = vadd.f32 %v1056, %v1172
    %v1174 = vpop.f32.mrb[0].mxu0
    %v1175 = vpop.f32.mrb[0].mxu0
    %v1176 = vadd.f32 %v1056, %v1175
    %v1177 = vpop.f32.mrb[0].mxu0
    %1178 = vmatprep.mubr.bf16.mxu0 0
    %1179 = vmatmul.mubr.bf16.gmra.mrb[0].mxu0 %v1032
    %v1180 = vpop.f32.mrb[0].mxu0
    %v1181 = vadd.f32 %v1056, %v1180
    %v1182 = vpop.f32.mrb[0].mxu0
    %v1183 = vpop.f32.mrb[0].mxu0
    %v1184 = vadd.f32 %v1056, %v1183
    %v1185 = vpop.f32.mrb[0].mxu0
    %1186 = vmatprep.mubr.bf16.mxu0 0
    %1187 = vmatmul.mubr.bf16.gmra.mrb[0].mxu0 %v1033
    %v1188 = vpop.f32.mrb[0].mxu0
    %v1189 = vadd.f32 %v1056, %v1188
    %v1190 = vpop.f32.mrb[0].mxu0
    %v1191 = vpop.f32.mrb[0].mxu0
    %v1192 = vadd.f32 %v1056, %v1191
    %v1193 = vpop.f32.mrb[0].mxu0
    %1194 = vmatprep.mubr.bf16.mxu0 0
    %1195 = vmatmul.mubr.bf16.gmra.mrb[0].mxu0 %v1034
    %v1196 = vpop.f32.mrb[0].mxu0
    %v1197 = vadd.f32 %v1056, %v1196
    %v1198 = vpop.f32.mrb[0].mxu0
    %v1199 = vpop.f32.mrb[0].mxu0
    %v1200 = vadd.f32 %v1056, %v1199
    %v1201 = vpop.f32.mrb[0].mxu0
    %1202 = vdwg.mxu0
    %1203 = vst [vmem:[%s7] sm:$0xff] %v1141
    %1204 = vst [vmem:[%s7 + $0x8] sm:$0xff] %v1144
    %1205 = vst [vmem:[%s7 + $0x10] sm:$0xff] %v1149
    %1206 = vst [vmem:[%s7 + $0x18] sm:$0xff] %v1152
    %1207 = vst [vmem:[%s7 + $0x20] sm:$0xff] %v1157
    %1208 = vst [vmem:[%s7 + $0x28] sm:$0xff] %v1160
    %1209 = vst [vmem:[%s7 + $0x30] sm:$0xff] %v1165
    %1210 = vst [vmem:[%s7 + $0x38] sm:$0xff] %v1168
    %1211 = vst [vmem:[%s7 + $0x40] sm:$0xff] %v1173
    %1212 = vst [vmem:[%s7 + $0x48] sm:$0xff] %v1176
    %1213 = vst [vmem:[%s7 + $0x50] sm:$0xff] %v1181
    %1214 = vst [vmem:[%s7 + $0x58] sm:$0xff] %v1184
    %1215 = vst [vmem:[%s7 + $0x60] sm:$0xff] %v1189
    %1216 = vst [vmem:[%s7 + $0x68] sm:$0xff] %v1192
    %1217 = vst [vmem:[%s7 + $0x70] sm:$0xff] %v1197
    %1218 = vst [vmem:[%s7 + $0x78] sm:$0xff] %v1200
    // Predicated region
    $region38: #{forward.1} parent=1 // pred_check
      _
    $region39: #{forward.1} parent=1 // pred_check_branch
      %1220 = sbr.rel (0) target = $region41
    $region40: #{forward.1} parent=1 // pred_region
      _
    $region41: #{forward.1} parent=1 // pred_fallthru
      _
    // Predicated region
    $region42: #{forward.1} parent=1 // pred_check
      _
    $region43: #{forward.1} parent=1 // pred_check_branch
      %1222 = sbr.rel (0) target = $region45
    $region44: #{forward.1} parent=1 // pred_region
      _
    $region45: #{forward.1} parent=1 // pred_fallthru
      _
    %1223 = vsyncpa [#allocation3], 1
    %1224 = vsyncpa [#allocation5], 1

// kernel: forward.1
$region0: #{forward.1}
  #allocation0 [shape = 'u32[]', space=smem, size = 0x4, offset = 0x4, fixed_abs, tag = 'smem constant byte address 0x4 - core index']
  #allocation1 [shape = 'u32[144,128]{1,0:T(1,128)}', space=vmem, size = 0x12000, scoped, tag = 'internal scratch']
  %s0 = inlined_call_operand.vmem [shape: bf16[128,128], index: 0, kind: input, shape index: {}]
  %s1 = inlined_call_operand.vmem [shape: bf16[128,128], index: 1, kind: input, shape index: {}]
  %s2 = inlined_call_operand.vmem [shape: f32[4,128], index: 2, kind: input, shape index: {}]
  %s3 = inlined_call_operand.hbm [shape: bf16[128,128], index: 3, kind: input, shape index: {}]
  %s4 = inlined_call_operand.vmem [shape: f32[4,128], index: 4, kind: input, shape index: {}]
  %s5 = inlined_call_operand.hbm [shape: bf16[128,128], index: 5, kind: input, shape index: {}]
  %s6 = inlined_call_operand.vmem [shape: f32[1,128], index: 6, kind: input, shape index: {}]
  %s7 = inlined_call_operand.vmem [shape: f32[128,128], index: 7, kind: output, shape index: {}]
  %s8 = sld [smem:[#allocation0]]
  $region46: #{forward.1} parent=0
    _
  %s10 = ssub.s32 1, %s8
  %s11 = scalar_select 0, %s10, %s8
  $region1: #{forward.1} parent=0
    #allocation2 [shape = 'u8[32768]{0}', space=vmem, size = 0x8000, scoped, tag = 'input window, operand 3, single buffered']
    #allocation3 [shape = 's32[1]{0}', space=sflag, size = 0x4, scoped, tag = 'scoped memory for forward.1']
    #allocation4 [shape = 'u8[32768]{0}', space=vmem, size = 0x8000, scoped, tag = 'input window, operand 5, single buffered']
    #allocation5 [shape = 's32[1]{0}', space=sflag, size = 0x4, scoped, tag = 'scoped memory for forward.1']
    %12 = vsyncpa [#allocation3], 0
    %13 = vsyncpa [#allocation5], 0
    // Predicated region
    $region2: #{forward.1} parent=1 // pred_check
      _
    $region3: #{forward.1} parent=1 // pred_check_branch
      %15 = sbr.rel (0) target = $region5
    $region4: #{forward.1} parent=1 // pred_region
      _
    $region5: #{forward.1} parent=1 // pred_fallthru
      _
    // Predicated region
    $region6: #{forward.1} parent=1 // pred_check
      _
    $region7: #{forward.1} parent=1 // pred_check_branch
      %17 = sbr.rel (0) target = $region9
    $region8: #{forward.1} parent=1 // pred_region
      _
    $region9: #{forward.1} parent=1 // pred_fallthru
      _
    // Predicated region
    $region10: #{forward.1} parent=1 // pred_check
      _
    $region11: #{forward.1} parent=1 // pred_check_branch
      %19 = sbr.rel (0) target = $region13
    $region12: #{forward.1} parent=1 // pred_region
      _
    $region13: #{forward.1} parent=1 // pred_fallthru
      _
    // Predicated region
    $region14: #{forward.1} parent=1 // pred_check
      _
    $region15: #{forward.1} parent=1 // pred_check_branch
      %21 = sbr.rel (0) target = $region17
    $region16: #{forward.1} parent=1 // pred_region
      %s23 = ssub.s32 1024, 1024
      %24 = vsyncadd [#allocation3], %s23
      %s25 = sshll.u32 [#allocation2], 4
      %s26 = int_to_ptr.vmem [resolvable:$true] %s25
      %31 = dma.hbm_to_vmem [thread:$0]  %s3, 1024, %s26, [#allocation3], 64, 64, 4
    $region17: #{forward.1} parent=1 // pred_fallthru
      _
    // Predicated region
    $region18: #{forward.1} parent=1 // pred_check
      _
    $region19: #{forward.1} parent=1 // pred_check_branch
      %33 = sbr.rel (0) target = $region21
    $region20: #{forward.1} parent=1 // pred_region
      _
    $region21: #{forward.1} parent=1 // pred_fallthru
      _
    // Predicated region
    $region22: #{forward.1} parent=1 // pred_check
      _
    $region23: #{forward.1} parent=1 // pred_check_branch
      %35 = sbr.rel (0) target = $region25
    $region24: #{forward.1} parent=1 // pred_region
      %s37 = ssub.s32 1024, 1024
      %38 = vsyncadd [#allocation5], %s37
      %s39 = sshll.u32 [#allocation4], 4
      %s40 = int_to_ptr.vmem [resolvable:$true] %s39
      %45 = dma.hbm_to_vmem [thread:$0]  %s5, 1024, %s40, [#allocation5], 64, 64, 4
    $region25: #{forward.1} parent=1 // pred_fallthru
      _
    // Predicated region
    $region26: #{forward.1} parent=1 // pred_check
      _
    $region27: #{forward.1} parent=1 // pred_check_branch
      %47 = sbr.rel (0) target = $region29
    $region28: #{forward.1} parent=1 // pred_region
      _
    $region29: #{forward.1} parent=1 // pred_fallthru
      _
    // Predicated region
    $region30: #{forward.1} parent=1 // pred_check
      _
    $region31: #{forward.1} parent=1 // pred_check_branch
      %49 = sbr.rel (0) target = $region33
    $region32: #{forward.1} parent=1 // pred_region
      %50 = dma.done [#allocation3], 1024
    $region33: #{forward.1} parent=1 // pred_fallthru
      _
    // Predicated region
    $region34: #{forward.1} parent=1 // pred_check
      _
    $region35: #{forward.1} parent=1 // pred_check_branch
      %52 = sbr.rel (0) target = $region37
    $region36: #{forward.1} parent=1 // pred_region
      %53 = dma.done [#allocation5], 1024
    $region37: #{forward.1} parent=1 // pred_fallthru
      _
    %v55 = vld [vmem:[%s0] sm:$0xf]
    %v56 = vld [vmem:[%s0 + $0x4] sm:$0xf]
    %v57 = vld [vmem:[%s0 + $0x8] sm:$0xf]
    %v58 = vld [vmem:[%s0 + $0xc] sm:$0xf]
    %v59 = vld [vmem:[%s0 + $0x10] sm:$0xf]
    %v60 = vld [vmem:[%s0 + $0x14] sm:$0xf]
    %v61 = vld [vmem:[%s0 + $0x18] sm:$0xf]
    %v62 = vld [vmem:[%s0 + $0x1c] sm:$0xf]
    %v63 = vld [vmem:[%s0 + $0x20] sm:$0xf]
    %v64 = vld [vmem:[%s0 + $0x24] sm:$0xf]
    %v65 = vld [vmem:[%s0 + $0x28] sm:$0xf]
    %v66 = vld [vmem:[%s0 + $0x2c] sm:$0xf]
    %v67 = vld [vmem:[%s0 + $0x30] sm:$0xf]
    %v68 = vld [vmem:[%s0 + $0x34] sm:$0xf]
    %v69 = vld [vmem:[%s0 + $0x38] sm:$0xf]
    %v70 = vld [vmem:[%s0 + $0x3c] sm:$0xf]
    %v71 = vld [vmem:[%s1] sm:$0xf]
    %v72 = vld [vmem:[%s1 + $0x4] sm:$0xf]
    %v73 = vld [vmem:[%s1 + $0x8] sm:$0xf]
    %v74 = vld [vmem:[%s1 + $0xc] sm:$0xf]
    %v75 = vld [vmem:[%s1 + $0x10] sm:$0xf]
    %v76 = vld [vmem:[%s1 + $0x14] sm:$0xf]
    %v77 = vld [vmem:[%s1 + $0x18] sm:$0xf]
    %v78 = vld [vmem:[%s1 + $0x1c] sm:$0xf]
    %v79 = vld [vmem:[%s1 + $0x20] sm:$0xf]
    %v80 = vld [vmem:[%s1 + $0x24] sm:$0xf]
    %v81 = vld [vmem:[%s1 + $0x28] sm:$0xf]
    %v82 = vld [vmem:[%s1 + $0x2c] sm:$0xf]
    %v83 = vld [vmem:[%s1 + $0x30] sm:$0xf]
    %v84 = vld [vmem:[%s1 + $0x34] sm:$0xf]
    %v85 = vld [vmem:[%s1 + $0x38] sm:$0xf]
    %v86 = vld [vmem:[%s1 + $0x3c] sm:$0xf]
    %v87 = vld [vmem:[%s2] sm:$0xf]
    %v88 = vlaneseq
    %v89 = vshrl.u32 %v88, 7
    %v90 = vsub.s32 0, %v89
    %v91 = vrot.slane %v87, %v90
    %v108 = vunpack.c.l.b16 %v55
    %v109 = vunpack.c.l.b16 %v56
    %v110 = vunpack.c.l.b16 %v57
    %v111 = vunpack.c.l.b16 %v58
    %v112 = vunpack.c.l.b16 %v59
    %v113 = vunpack.c.l.b16 %v60
    %v114 = vunpack.c.l.b16 %v61
    %v115 = vunpack.c.l.b16 %v62
    %v116 = vunpack.c.l.b16 %v63
    %v117 = vunpack.c.l.b16 %v64
    %v118 = vunpack.c.l.b16 %v65
    %v119 = vunpack.c.l.b16 %v66
    %v120 = vunpack.c.l.b16 %v67
    %v121 = vunpack.c.l.b16 %v68
    %v122 = vunpack.c.l.b16 %v69
    %v123 = vunpack.c.l.b16 %v70
    %v124 = vpack.c.b16 %v109, %v108
    %v125 = vpack.c.b16 %v111, %v110
    %v126 = vpack.c.b16 %v113, %v112
    %v127 = vpack.c.b16 %v115, %v114
    %v128 = vpack.c.b16 %v117, %v116
    %v129 = vpack.c.b16 %v119, %v118
    %v130 = vpack.c.b16 %v121, %v120
    %v131 = vpack.c.b16 %v123, %v122
    %v156 = vunpack.c.l.b16 %v71
    %v157 = vunpack.c.l.b16 %v72
    %v158 = vunpack.c.l.b16 %v73
    %v159 = vunpack.c.l.b16 %v74
    %v160 = vunpack.c.l.b16 %v75
    %v161 = vunpack.c.l.b16 %v76
    %v162 = vunpack.c.l.b16 %v77
    %v163 = vunpack.c.l.b16 %v78
    %v164 = vunpack.c.l.b16 %v79
    %v165 = vunpack.c.l.b16 %v80
    %v166 = vunpack.c.l.b16 %v81
    %v167 = vunpack.c.l.b16 %v82
    %v168 = vunpack.c.l.b16 %v83
    %v169 = vunpack.c.l.b16 %v84
    %v170 = vunpack.c.l.b16 %v85
    %v171 = vunpack.c.l.b16 %v86
    %v172 = vpack.c.b16 %v157, %v156
    %v173 = vpack.c.b16 %v159, %v158
    %v174 = vpack.c.b16 %v161, %v160
    %v175 = vpack.c.b16 %v163, %v162
    %v176 = vpack.c.b16 %v165, %v164
    %v177 = vpack.c.b16 %v167, %v166
    %v178 = vpack.c.b16 %v169, %v168
    %v179 = vpack.c.b16 %v171, %v170
    %188 = vmatprep.subr.bf16.mxu0 0
    %189 = vmatpush1.bf16.msra.mxu0 %v172
    %190 = vmatprep.subr.bf16.mxu0 0
    %191 = vmatpush1.bf16.msra.mxu0 %v173
    %192 = vmatprep.subr.bf16.mxu0 0
    %193 = vmatpush1.bf16.msra.mxu0 %v174
    %194 = vmatprep.subr.bf16.mxu0 0
    %195 = vmatpush1.bf16.msra.mxu0 %v175
    %196 = vmatprep.subr.bf16.mxu0 0
    %197 = vmatpush1.bf16.msra.mxu0 %v176
    %198 = vmatprep.subr.bf16.mxu0 0
    %199 = vmatpush1.bf16.msra.mxu0 %v177
    %200 = vmatprep.subr.bf16.mxu0 0
    %201 = vmatpush1.bf16.msra.mxu0 %v178
    %202 = vmatprep.subr.bf16.mxu0 0
    %203 = vmatpush1.bf16.msra.mxu0 %v179
    %204 = vmatprep.subr.bf16.mxu0 0
    %205 = vmatpush1.bf16.msra.mxu0 0
    %206 = vmatprep.subr.bf16.mxu0 0
    %207 = vmatpush1.bf16.msra.mxu0 0
    %208 = vmatprep.subr.bf16.mxu0 0
    %209 = vmatpush1.bf16.msra.mxu0 0
    %210 = vmatprep.subr.bf16.mxu0 0
    %211 = vmatpush1.bf16.msra.mxu0 0
    %212 = vmatprep.subr.bf16.mxu0 0
    %213 = vmatpush1.bf16.msra.mxu0 0
    %214 = vmatprep.subr.bf16.mxu0 0
    %215 = vmatpush1.bf16.msra.mxu0 0
    %216 = vmatprep.subr.bf16.mxu0 0
    %217 = vmatpush1.bf16.msra.mxu0 0
    %218 = vmatprep.subr.bf16.mxu0 0
    %219 = vmatpush1.bf16.msra.mxu0 0
    %220 = vmatprep.mubr.bf16.mxu0 0
    %221 = vmatmul.mubr.bf16.gmra.mrb[0].mxu0 %v124
    %v222 = vpop.f32.mrb[0].mxu0
    %v223 = vadd.f32 %v91, %v222
    %v224 = vpop.f32.mrb[0].mxu0
    %v225 = vpop.f32.mrb[0].mxu0
    %v226 = vadd.f32 %v91, %v225
    %v227 = vpop.f32.mrb[0].mxu0
    %228 = vmatprep.mubr.bf16.mxu0 0
    %229 = vmatmul.mubr.bf16.gmra.mrb[0].mxu0 %v125
    %v230 = vpop.f32.mrb[0].mxu0
    %v231 = vadd.f32 %v91, %v230
    %v232 = vpop.f32.mrb[0].mxu0
    %v233 = vpop.f32.mrb[0].mxu0
    %v234 = vadd.f32 %v91, %v233
    %v235 = vpop.f32.mrb[0].mxu0
    %236 = vmatprep.mubr.bf16.mxu0 0
    %237 = vmatmul.mubr.bf16.gmra.mrb[0].mxu0 %v126
    %v238 = vpop.f32.mrb[0].mxu0
    %v239 = vadd.f32 %v91, %v238
    %v240 = vpop.f32.mrb[0].mxu0
    %v241 = vpop.f32.mrb[0].mxu0
    %v242 = vadd.f32 %v91, %v241
    %v243 = vpop.f32.mrb[0].mxu0
    %244 = vmatprep.mubr.bf16.mxu0 0
    %245 = vmatmul.mubr.bf16.gmra.mrb[0].mxu0 %v127
    %v246 = vpop.f32.mrb[0].mxu0
    %v247 = vadd.f32 %v91, %v246
    %v248 = vpop.f32.mrb[0].mxu0
    %v249 = vpop.f32.mrb[0].mxu0
    %v250 = vadd.f32 %v91, %v249
    %v251 = vpop.f32.mrb[0].mxu0
    %252 = vmatprep.mubr.bf16.mxu0 0
    %253 = vmatmul.mubr.bf16.gmra.mrb[0].mxu0 %v128
    %v254 = vpop.f32.mrb[0].mxu0
    %v255 = vadd.f32 %v91, %v254
    %v256 = vpop.f32.mrb[0].mxu0
    %v257 = vpop.f32.mrb[0].mxu0
    %v258 = vadd.f32 %v91, %v257
    %v259 = vpop.f32.mrb[0].mxu0
    %260 = vmatprep.mubr.bf16.mxu0 0
    %261 = vmatmul.mubr.bf16.gmra.mrb[0].mxu0 %v129
    %v262 = vpop.f32.mrb[0].mxu0
    %v263 = vadd.f32 %v91, %v262
    %v264 = vpop.f32.mrb[0].mxu0
    %v265 = vpop.f32.mrb[0].mxu0
    %v266 = vadd.f32 %v91, %v265
    %v267 = vpop.f32.mrb[0].mxu0
    %268 = vmatprep.mubr.bf16.mxu0 0
    %269 = vmatmul.mubr.bf16.gmra.mrb[0].mxu0 %v130
    %v270 = vpop.f32.mrb[0].mxu0
    %v271 = vadd.f32 %v91, %v270
    %v272 = vpop.f32.mrb[0].mxu0
    %v273 = vpop.f32.mrb[0].mxu0
    %v274 = vadd.f32 %v91, %v273
    %v275 = vpop.f32.mrb[0].mxu0
    %276 = vmatprep.mubr.bf16.mxu0 0
    %277 = vmatmul.mubr.bf16.gmra.mrb[0].mxu0 %v131
    %v278 = vpop.f32.mrb[0].mxu0
    %v279 = vadd.f32 %v91, %v278
    %v280 = vpop.f32.mrb[0].mxu0
    %v281 = vpop.f32.mrb[0].mxu0
    %v282 = vadd.f32 %v91, %v281
    %v283 = vpop.f32.mrb[0].mxu0
    %284 = vdwg.mxu0
    %v285 = vlaneseq
    %v286 = vshrl.u32 %v285, 7
    %v287 = vsub.s32 3, %v286
    %v288 = vrot.slane %v87, %v287
    %v289 = vmul.f32 %v223, %v288
    %v290 = vmul.f32 %v226, %v288
    %v291 = vmul.f32 %v231, %v288
    %v292 = vmul.f32 %v234, %v288
    %v293 = vmul.f32 %v239, %v288
    %v294 = vmul.f32 %v242, %v288
    %v295 = vmul.f32 %v247, %v288
    %v296 = vmul.f32 %v250, %v288
    %v297 = vmul.f32 %v255, %v288
    %v298 = vmul.f32 %v258, %v288
    %v299 = vmul.f32 %v263, %v288
    %v300 = vmul.f32 %v266, %v288
    %v301 = vmul.f32 %v271, %v288
    %v302 = vmul.f32 %v274, %v288
    %v303 = vmul.f32 %v279, %v288
    %v304 = vmul.f32 %v282, %v288
    %305 = vadd.xlane.f32.xlu0 %v289
    %v306 = vpop.xlane.xlu0 %305
    %307 = vadd.xlane.f32.xlu0 %v290
    %v308 = vpop.xlane.xlu0 %307
    %309 = vadd.xlane.f32.xlu0 %v291
    %v310 = vpop.xlane.xlu0 %309
    %311 = vadd.xlane.f32.xlu0 %v292
    %v312 = vpop.xlane.xlu0 %311
    %313 = vadd.xlane.f32.xlu0 %v293
    %v314 = vpop.xlane.xlu0 %313
    %315 = vadd.xlane.f32.xlu0 %v294
    %v316 = vpop.xlane.xlu0 %315
    %317 = vadd.xlane.f32.xlu0 %v295
    %v318 = vpop.xlane.xlu0 %317
    %319 = vadd.xlane.f32.xlu0 %v296
    %v320 = vpop.xlane.xlu0 %319
    %321 = vadd.xlane.f32.xlu0 %v297
    %v322 = vpop.xlane.xlu0 %321
    %323 = vadd.xlane.f32.xlu0 %v298
    %v324 = vpop.xlane.xlu0 %323
    %325 = vadd.xlane.f32.xlu0 %v299
    %v326 = vpop.xlane.xlu0 %325
    %327 = vadd.xlane.f32.xlu0 %v300
    %v328 = vpop.xlane.xlu0 %327
    %329 = vadd.xlane.f32.xlu0 %v301
    %v330 = vpop.xlane.xlu0 %329
    %331 = vadd.xlane.f32.xlu0 %v302
    %v332 = vpop.xlane.xlu0 %331
    %333 = vadd.xlane.f32.xlu0 %v303
    %v334 = vpop.xlane.xlu0 %333
    %335 = vadd.xlane.f32.xlu0 %v304
    %v336 = vpop.xlane.xlu0 %335
    %v337 = vmul.f32 %v306, 0.015625
    %v338 = vmul.f32 %v308, 0.015625
    %v339 = vmul.f32 %v310, 0.015625
    %v340 = vmul.f32 %v312, 0.015625
    %v341 = vmul.f32 %v314, 0.015625
    %v342 = vmul.f32 %v316, 0.015625
    %v343 = vmul.f32 %v318, 0.015625
    %v344 = vmul.f32 %v320, 0.015625
    %v345 = vmul.f32 %v322, 0.015625
    %v346 = vmul.f32 %v324, 0.015625
    %v347 = vmul.f32 %v326, 0.015625
    %v348 = vmul.f32 %v328, 0.015625
    %v349 = vmul.f32 %v330, 0.015625
    %v350 = vmul.f32 %v332, 0.015625
    %v351 = vmul.f32 %v334, 0.015625
    %v352 = vmul.f32 %v336, 0.015625
    %v353 = vsub.f32 %v289, %v337
    %v354 = vsub.f32 %v290, %v338
    %v355 = vsub.f32 %v291, %v339
    %v356 = vsub.f32 %v292, %v340
    %v357 = vsub.f32 %v293, %v341
    %v358 = vsub.f32 %v294, %v342
    %v359 = vsub.f32 %v295, %v343
    %v360 = vsub.f32 %v296, %v344
    %v361 = vsub.f32 %v297, %v345
    %v362 = vsub.f32 %v298, %v346
    %v363 = vsub.f32 %v299, %v347
    %v364 = vsub.f32 %v300, %v348
    %v365 = vsub.f32 %v301, %v349
    %v366 = vsub.f32 %v302, %v350
    %v367 = vsub.f32 %v303, %v351
    %v368 = vsub.f32 %v304, %v352
    %v369 = vmul.f32 %v353, %v288
    %v370 = vmul.f32 %v354, %v288
    %v371 = vmul.f32 %v355, %v288
    %v372 = vmul.f32 %v356, %v288
    %v373 = vmul.f32 %v357, %v288
    %v374 = vmul.f32 %v358, %v288
    %v375 = vmul.f32 %v359, %v288
    %v376 = vmul.f32 %v360, %v288
    %v377 = vmul.f32 %v361, %v288
    %v378 = vmul.f32 %v362, %v288
    %v379 = vmul.f32 %v363, %v288
    %v380 = vmul.f32 %v364, %v288
    %v381 = vmul.f32 %v365, %v288
    %v382 = vmul.f32 %v366, %v288
    %v383 = vmul.f32 %v367, %v288
    %v384 = vmul.f32 %v368, %v288
    %v385 = vmul.f32 %v369, %v369
    %v386 = vmul.f32 %v370, %v370
    %v387 = vmul.f32 %v371, %v371
    %v388 = vmul.f32 %v372, %v372
    %v389 = vmul.f32 %v373, %v373
    %v390 = vmul.f32 %v374, %v374
    %v391 = vmul.f32 %v375, %v375
    %v392 = vmul.f32 %v376, %v376
    %v393 = vmul.f32 %v377, %v377
    %v394 = vmul.f32 %v378, %v378
    %v395 = vmul.f32 %v379, %v379
    %v396 = vmul.f32 %v380, %v380
    %v397 = vmul.f32 %v381, %v381
    %v398 = vmul.f32 %v382, %v382
    %v399 = vmul.f32 %v383, %v383
    %v400 = vmul.f32 %v384, %v384
    %401 = vadd.xlane.f32.xlu0 %v385
    %v402 = vpop.xlane.xlu0 %401
    %403 = vadd.xlane.f32.xlu0 %v386
    %v404 = vpop.xlane.xlu0 %403
    %405 = vadd.xlane.f32.xlu0 %v387
    %v406 = vpop.xlane.xlu0 %405
    %407 = vadd.xlane.f32.xlu0 %v388
    %v408 = vpop.xlane.xlu0 %407
    %409 = vadd.xlane.f32.xlu0 %v389
    %v410 = vpop.xlane.xlu0 %409
    %411 = vadd.xlane.f32.xlu0 %v390
    %v412 = vpop.xlane.xlu0 %411
    %413 = vadd.xlane.f32.xlu0 %v391
    %v414 = vpop.xlane.xlu0 %413
    %415 = vadd.xlane.f32.xlu0 %v392
    %v416 = vpop.xlane.xlu0 %415
    %417 = vadd.xlane.f32.xlu0 %v393
    %v418 = vpop.xlane.xlu0 %417
    %419 = vadd.xlane.f32.xlu0 %v394
    %v420 = vpop.xlane.xlu0 %419
    %421 = vadd.xlane.f32.xlu0 %v395
    %v422 = vpop.xlane.xlu0 %421
    %423 = vadd.xlane.f32.xlu0 %v396
    %v424 = vpop.xlane.xlu0 %423
    %425 = vadd.xlane.f32.xlu0 %v397
    %v426 = vpop.xlane.xlu0 %425
    %427 = vadd.xlane.f32.xlu0 %v398
    %v428 = vpop.xlane.xlu0 %427
    %429 = vadd.xlane.f32.xlu0 %v399
    %v430 = vpop.xlane.xlu0 %429
    %431 = vadd.xlane.f32.xlu0 %v400
    %v432 = vpop.xlane.xlu0 %431
    %v433 = vmul.f32 %v402, 0.015625
    %v434 = vmul.f32 %v404, 0.015625
    %v435 = vmul.f32 %v406, 0.015625
    %v436 = vmul.f32 %v408, 0.015625
    %v437 = vmul.f32 %v410, 0.015625
    %v438 = vmul.f32 %v412, 0.015625
    %v439 = vmul.f32 %v414, 0.015625
    %v440 = vmul.f32 %v416, 0.015625
    %v441 = vmul.f32 %v418, 0.015625
    %v442 = vmul.f32 %v420, 0.015625
    %v443 = vmul.f32 %v422, 0.015625
    %v444 = vmul.f32 %v424, 0.015625
    %v445 = vmul.f32 %v426, 0.015625
    %v446 = vmul.f32 %v428, 0.015625
    %v447 = vmul.f32 %v430, 0.015625
    %v448 = vmul.f32 %v432, 0.015625
    %v449 = vadd.f32 %v433, 1e-05
    %v450 = vadd.f32 %v434, 1e-05
    %v451 = vadd.f32 %v435, 1e-05
    %v452 = vadd.f32 %v436, 1e-05
    %v453 = vadd.f32 %v437, 1e-05
    %v454 = vadd.f32 %v438, 1e-05
    %v455 = vadd.f32 %v439, 1e-05
    %v456 = vadd.f32 %v440, 1e-05
    %v457 = vadd.f32 %v441, 1e-05
    %v458 = vadd.f32 %v442, 1e-05
    %v459 = vadd.f32 %v443, 1e-05
    %v460 = vadd.f32 %v444, 1e-05
    %v461 = vadd.f32 %v445, 1e-05
    %v462 = vadd.f32 %v446, 1e-05
    %v463 = vadd.f32 %v447, 1e-05
    %v464 = vadd.f32 %v448, 1e-05
    %v465 = vrsqrt.pop %v449
    %v466 = vrsqrt.pop %v450
    %v467 = vrsqrt.pop %v451
    %v468 = vrsqrt.pop %v452
    %v469 = vrsqrt.pop %v453
    %v470 = vrsqrt.pop %v454
    %v471 = vrsqrt.pop %v455
    %v472 = vrsqrt.pop %v456
    %v473 = vrsqrt.pop %v457
    %v474 = vrsqrt.pop %v458
    %v475 = vrsqrt.pop %v459
    %v476 = vrsqrt.pop %v460
    %v477 = vrsqrt.pop %v461
    %v478 = vrsqrt.pop %v462
    %v479 = vrsqrt.pop %v463
    %v480 = vrsqrt.pop %v464
    %v481 = vmul.f32 %v369, %v465
    %v482 = vmul.f32 %v370, %v466
    %v483 = vmul.f32 %v371, %v467
    %v484 = vmul.f32 %v372, %v468
    %v485 = vmul.f32 %v373, %v469
    %v486 = vmul.f32 %v374, %v470
    %v487 = vmul.f32 %v375, %v471
    %v488 = vmul.f32 %v376, %v472
    %v489 = vmul.f32 %v377, %v473
    %v490 = vmul.f32 %v378, %v474
    %v491 = vmul.f32 %v379, %v475
    %v492 = vmul.f32 %v380, %v476
    %v493 = vmul.f32 %v381, %v477
    %v494 = vmul.f32 %v382, %v478
    %v495 = vmul.f32 %v383, %v479
    %v496 = vmul.f32 %v384, %v480
    %v497 = vlaneseq
    %v498 = vshrl.u32 %v497, 7
    %v499 = vsub.s32 1, %v498
    %v500 = vrot.slane %v87, %v499
    %v501 = vmul.f32 %v481, %v500
    %v502 = vmul.f32 %v482, %v500
    %v503 = vmul.f32 %v483, %v500
    %v504 = vmul.f32 %v484, %v500
    %v505 = vmul.f32 %v485, %v500
    %v506 = vmul.f32 %v486, %v500
    %v507 = vmul.f32 %v487, %v500
    %v508 = vmul.f32 %v488, %v500
    %v509 = vmul.f32 %v489, %v500
    %v510 = vmul.f32 %v490, %v500
    %v511 = vmul.f32 %v491, %v500
    %v512 = vmul.f32 %v492, %v500
    %v513 = vmul.f32 %v493, %v500
    %v514 = vmul.f32 %v494, %v500
    %v515 = vmul.f32 %v495, %v500
    %v516 = vmul.f32 %v496, %v500
    %v517 = vlaneseq
    %v518 = vshrl.u32 %v517, 7
    %v519 = vsub.s32 2, %v518
    %v520 = vrot.slane %v87, %v519
    %v521 = vadd.f32 %v501, %v520
    %v522 = vadd.f32 %v502, %v520
    %v523 = vadd.f32 %v503, %v520
    %v524 = vadd.f32 %v504, %v520
    %v525 = vadd.f32 %v505, %v520
    %v526 = vadd.f32 %v506, %v520
    %v527 = vadd.f32 %v507, %v520
    %v528 = vadd.f32 %v508, %v520
    %v529 = vadd.f32 %v509, %v520
    %v530 = vadd.f32 %v510, %v520
    %v531 = vadd.f32 %v511, %v520
    %v532 = vadd.f32 %v512, %v520
    %v533 = vadd.f32 %v513, %v520
    %v534 = vadd.f32 %v514, %v520
    %v535 = vadd.f32 %v515, %v520
    %v536 = vadd.f32 %v516, %v520
    %v537 = vmax.f32 %v521, 0.0
    %v538 = vmax.f32 %v522, 0.0
    %v539 = vmax.f32 %v523, 0.0
    %v540 = vmax.f32 %v524, 0.0
    %v541 = vmax.f32 %v525, 0.0
    %v542 = vmax.f32 %v526, 0.0
    %v543 = vmax.f32 %v527, 0.0
    %v544 = vmax.f32 %v528, 0.0
    %v545 = vmax.f32 %v529, 0.0
    %v546 = vmax.f32 %v530, 0.0
    %v547 = vmax.f32 %v531, 0.0
    %v548 = vmax.f32 %v532, 0.0
    %v549 = vmax.f32 %v533, 0.0
    %v550 = vmax.f32 %v534, 0.0
    %v551 = vmax.f32 %v535, 0.0
    %v552 = vmax.f32 %v536, 0.0
    %v553 = vmul.f32 %v537, %v288
    %v554 = vmul.f32 %v538, %v288
    %v555 = vmul.f32 %v539, %v288
    %v556 = vmul.f32 %v540, %v288
    %v557 = vmul.f32 %v541, %v288
    %v558 = vmul.f32 %v542, %v288
    %v559 = vmul.f32 %v543, %v288
    %v560 = vmul.f32 %v544, %v288
    %v561 = vmul.f32 %v545, %v288
    %v562 = vmul.f32 %v546, %v288
    %v563 = vmul.f32 %v547, %v288
    %v564 = vmul.f32 %v548, %v288
    %v565 = vmul.f32 %v549, %v288
    %v566 = vmul.f32 %v550, %v288
    %v567 = vmul.f32 %v551, %v288
    %v568 = vmul.f32 %v552, %v288
    %v569 = vpack.c.bf16 %v554, %v553
    %v570 = vpack.c.bf16 %v556, %v555
    %v571 = vpack.c.bf16 %v558, %v557
    %v572 = vpack.c.bf16 %v560, %v559
    %v573 = vpack.c.bf16 %v562, %v561
    %v574 = vpack.c.bf16 %v564, %v563
    %v575 = vpack.c.bf16 %v566, %v565
    %v576 = vpack.c.bf16 %v568, %v567
    %v577 = vld [vmem:[#allocation2] sm:$0xf]
    %v578 = vld [vmem:[#allocation2 + $0x4] sm:$0xf]
    %v579 = vld [vmem:[#allocation2 + $0x8] sm:$0xf]
    %v580 = vld [vmem:[#allocation2 + $0xc] sm:$0xf]
    %v581 = vld [vmem:[#allocation2 + $0x10] sm:$0xf]
    %v582 = vld [vmem:[#allocation2 + $0x14] sm:$0xf]
    %v583 = vld [vmem:[#allocation2 + $0x18] sm:$0xf]
    %v584 = vld [vmem:[#allocation2 + $0x1c] sm:$0xf]
    %v585 = vld [vmem:[#allocation2 + $0x20] sm:$0xf]
    %v586 = vld [vmem:[#allocation2 + $0x24] sm:$0xf]
    %v587 = vld [vmem:[#allocation2 + $0x28] sm:$0xf]
    %v588 = vld [vmem:[#allocation2 + $0x2c] sm:$0xf]
    %v589 = vld [vmem:[#allocation2 + $0x30] sm:$0xf]
    %v590 = vld [vmem:[#allocation2 + $0x34] sm:$0xf]
    %v591 = vld [vmem:[#allocation2 + $0x38] sm:$0xf]
    %v592 = vld [vmem:[#allocation2 + $0x3c] sm:$0xf]
    %v593 = vld [vmem:[%s4] sm:$0xf]
    %v594 = vlaneseq
    %v595 = vshrl.u32 %v594, 7
    %v596 = vsub.s32 0, %v595
    %v597 = vrot.slane %v593, %v596
    %v614 = vunpack.c.l.b16 %v577
    %v615 = vunpack.c.l.b16 %v578
    %v616 = vunpack.c.l.b16 %v579
    %v617 = vunpack.c.l.b16 %v580
    %v618 = vunpack.c.l.b16 %v581
    %v619 = vunpack.c.l.b16 %v582
    %v620 = vunpack.c.l.b16 %v583
    %v621 = vunpack.c.l.b16 %v584
    %v622 = vunpack.c.l.b16 %v585
    %v623 = vunpack.c.l.b16 %v586
    %v624 = vunpack.c.l.b16 %v587
    %v625 = vunpack.c.l.b16 %v588
    %v626 = vunpack.c.l.b16 %v589
    %v627 = vunpack.c.l.b16 %v590
    %v628 = vunpack.c.l.b16 %v591
    %v629 = vunpack.c.l.b16 %v592
    %v630 = vpack.c.b16 %v615, %v614
    %v631 = vpack.c.b16 %v617, %v616
    %v632 = vpack.c.b16 %v619, %v618
    %v633 = vpack.c.b16 %v621, %v620
    %v634 = vpack.c.b16 %v623, %v622
    %v635 = vpack.c.b16 %v625, %v624
    %v636 = vpack.c.b16 %v627, %v626
    %v637 = vpack.c.b16 %v629, %v628
    %646 = vmatprep.subr.bf16.mxu0 0
    %647 = vmatpush1.bf16.msra.mxu0 %v630
    %648 = vmatprep.subr.bf16.mxu0 0
    %649 = vmatpush1.bf16.msra.mxu0 %v631
    %650 = vmatprep.subr.bf16.mxu0 0
    %651 = vmatpush1.bf16.msra.mxu0 %v632
    %652 = vmatprep.subr.bf16.mxu0 0
    %653 = vmatpush1.bf16.msra.mxu0 %v633
    %654 = vmatprep.subr.bf16.mxu0 0
    %655 = vmatpush1.bf16.msra.mxu0 %v634
    %656 = vmatprep.subr.bf16.mxu0 0
    %657 = vmatpush1.bf16.msra.mxu0 %v635
    %658 = vmatprep.subr.bf16.mxu0 0
    %659 = vmatpush1.bf16.msra.mxu0 %v636
    %660 = vmatprep.subr.bf16.mxu0 0
    %661 = vmatpush1.bf16.msra.mxu0 %v637
    %662 = vmatprep.subr.bf16.mxu0 0
    %663 = vmatpush1.bf16.msra.mxu0 0
    %664 = vmatprep.subr.bf16.mxu0 0
    %665 = vmatpush1.bf16.msra.mxu0 0
    %666 = vmatprep.subr.bf16.mxu0 0
    %667 = vmatpush1.bf16.msra.mxu0 0
    %668 = vmatprep.subr.bf16.mxu0 0
    %669 = vmatpush1.bf16.msra.mxu0 0
    %670 = vmatprep.subr.bf16.mxu0 0
    %671 = vmatpush1.bf16.msra.mxu0 0
    %672 = vmatprep.subr.bf16.mxu0 0
    %673 = vmatpush1.bf16.msra.mxu0 0
    %674 = vmatprep.subr.bf16.mxu0 0
    %675 = vmatpush1.bf16.msra.mxu0 0
    %676 = vmatprep.subr.bf16.mxu0 0
    %677 = vmatpush1.bf16.msra.mxu0 0
    %678 = vmatprep.mubr.bf16.mxu0 0
    %679 = vmatmul.mubr.bf16.gmra.mrb[0].mxu0 %v569
    %v680 = vpop.f32.mrb[0].mxu0
    %v681 = vadd.f32 %v597, %v680
    %v682 = vpop.f32.mrb[0].mxu0
    %v683 = vpop.f32.mrb[0].mxu0
    %v684 = vadd.f32 %v597, %v683
    %v685 = vpop.f32.mrb[0].mxu0
    %686 = vmatprep.mubr.bf16.mxu0 0
    %687 = vmatmul.mubr.bf16.gmra.mrb[0].mxu0 %v570
    %v688 = vpop.f32.mrb[0].mxu0
    %v689 = vadd.f32 %v597, %v688
    %v690 = vpop.f32.mrb[0].mxu0
    %v691 = vpop.f32.mrb[0].mxu0
    %v692 = vadd.f32 %v597, %v691
    %v693 = vpop.f32.mrb[0].mxu0
    %694 = vmatprep.mubr.bf16.mxu0 0
    %695 = vmatmul.mubr.bf16.gmra.mrb[0].mxu0 %v571
    %v696 = vpop.f32.mrb[0].mxu0
    %v697 = vadd.f32 %v597, %v696
    %v698 = vpop.f32.mrb[0].mxu0
    %v699 = vpop.f32.mrb[0].mxu0
    %v700 = vadd.f32 %v597, %v699
    %v701 = vpop.f32.mrb[0].mxu0
    %702 = vmatprep.mubr.bf16.mxu0 0
    %703 = vmatmul.mubr.bf16.gmra.mrb[0].mxu0 %v572
    %v704 = vpop.f32.mrb[0].mxu0
    %v705 = vadd.f32 %v597, %v704
    %v706 = vpop.f32.mrb[0].mxu0
    %v707 = vpop.f32.mrb[0].mxu0
    %v708 = vadd.f32 %v597, %v707
    %v709 = vpop.f32.mrb[0].mxu0
    %710 = vmatprep.mubr.bf16.mxu0 0
    %711 = vmatmul.mubr.bf16.gmra.mrb[0].mxu0 %v573
    %v712 = vpop.f32.mrb[0].mxu0
    %v713 = vadd.f32 %v597, %v712
    %v714 = vpop.f32.mrb[0].mxu0
    %v715 = vpop.f32.mrb[0].mxu0
    %v716 = vadd.f32 %v597, %v715
    %v717 = vpop.f32.mrb[0].mxu0
    %718 = vmatprep.mubr.bf16.mxu0 0
    %719 = vmatmul.mubr.bf16.gmra.mrb[0].mxu0 %v574
    %v720 = vpop.f32.mrb[0].mxu0
    %v721 = vadd.f32 %v597, %v720
    %v722 = vpop.f32.mrb[0].mxu0
    %v723 = vpop.f32.mrb[0].mxu0
    %v724 = vadd.f32 %v597, %v723
    %v725 = vpop.f32.mrb[0].mxu0
    %726 = vmatprep.mubr.bf16.mxu0 0
    %727 = vmatmul.mubr.bf16.gmra.mrb[0].mxu0 %v575
    %v728 = vpop.f32.mrb[0].mxu0
    %v729 = vadd.f32 %v597, %v728
    %v730 = vpop.f32.mrb[0].mxu0
    %v731 = vpop.f32.mrb[0].mxu0
    %v732 = vadd.f32 %v597, %v731
    %v733 = vpop.f32.mrb[0].mxu0
    %734 = vmatprep.mubr.bf16.mxu0 0
    %735 = vmatmul.mubr.bf16.gmra.mrb[0].mxu0 %v576
    %v736 = vpop.f32.mrb[0].mxu0
    %v737 = vadd.f32 %v597, %v736
    %v738 = vpop.f32.mrb[0].mxu0
    %v739 = vpop.f32.mrb[0].mxu0
    %v740 = vadd.f32 %v597, %v739
    %v741 = vpop.f32.mrb[0].mxu0
    %742 = vdwg.mxu0
    %v743 = vlaneseq
    %v744 = vshrl.u32 %v743, 7
    %v745 = vsub.s32 3, %v744
    %v746 = vrot.slane %v593, %v745
    %v747 = vmul.f32 %v681, %v746
    %v748 = vmul.f32 %v684, %v746
    %v749 = vmul.f32 %v689, %v746
    %v750 = vmul.f32 %v692, %v746
    %v751 = vmul.f32 %v697, %v746
    %v752 = vmul.f32 %v700, %v746
    %v753 = vmul.f32 %v705, %v746
    %v754 = vmul.f32 %v708, %v746
    %v755 = vmul.f32 %v713, %v746
    %v756 = vmul.f32 %v716, %v746
    %v757 = vmul.f32 %v721, %v746
    %v758 = vmul.f32 %v724, %v746
    %v759 = vmul.f32 %v729, %v746
    %v760 = vmul.f32 %v732, %v746
    %v761 = vmul.f32 %v737, %v746
    %v762 = vmul.f32 %v740, %v746
    %763 = vadd.xlane.f32.xlu0 %v747
    %v764 = vpop.xlane.xlu0 %763
    %765 = vadd.xlane.f32.xlu0 %v748
    %v766 = vpop.xlane.xlu0 %765
    %767 = vadd.xlane.f32.xlu0 %v749
    %v768 = vpop.xlane.xlu0 %767
    %769 = vadd.xlane.f32.xlu0 %v750
    %v770 = vpop.xlane.xlu0 %769
    %771 = vadd.xlane.f32.xlu0 %v751
    %v772 = vpop.xlane.xlu0 %771
    %773 = vadd.xlane.f32.xlu0 %v752
    %v774 = vpop.xlane.xlu0 %773
    %775 = vadd.xlane.f32.xlu0 %v753
    %v776 = vpop.xlane.xlu0 %775
    %777 = vadd.xlane.f32.xlu0 %v754
    %v778 = vpop.xlane.xlu0 %777
    %779 = vadd.xlane.f32.xlu0 %v755
    %v780 = vpop.xlane.xlu0 %779
    %781 = vadd.xlane.f32.xlu0 %v756
    %v782 = vpop.xlane.xlu0 %781
    %783 = vadd.xlane.f32.xlu0 %v757
    %v784 = vpop.xlane.xlu0 %783
    %785 = vadd.xlane.f32.xlu0 %v758
    %v786 = vpop.xlane.xlu0 %785
    %787 = vadd.xlane.f32.xlu0 %v759
    %v788 = vpop.xlane.xlu0 %787
    %789 = vadd.xlane.f32.xlu0 %v760
    %v790 = vpop.xlane.xlu0 %789
    %791 = vadd.xlane.f32.xlu0 %v761
    %v792 = vpop.xlane.xlu0 %791
    %793 = vadd.xlane.f32.xlu0 %v762
    %v794 = vpop.xlane.xlu0 %793
    %v795 = vmul.f32 %v764, 0.03125
    %v796 = vmul.f32 %v766, 0.03125
    %v797 = vmul.f32 %v768, 0.03125
    %v798 = vmul.f32 %v770, 0.03125
    %v799 = vmul.f32 %v772, 0.03125
    %v800 = vmul.f32 %v774, 0.03125
    %v801 = vmul.f32 %v776, 0.03125
    %v802 = vmul.f32 %v778, 0.03125
    %v803 = vmul.f32 %v780, 0.03125
    %v804 = vmul.f32 %v782, 0.03125
    %v805 = vmul.f32 %v784, 0.03125
    %v806 = vmul.f32 %v786, 0.03125
    %v807 = vmul.f32 %v788, 0.03125
    %v808 = vmul.f32 %v790, 0.03125
    %v809 = vmul.f32 %v792, 0.03125
    %v810 = vmul.f32 %v794, 0.03125
    %v811 = vsub.f32 %v747, %v795
    %v812 = vsub.f32 %v748, %v796
    %v813 = vsub.f32 %v749, %v797
    %v814 = vsub.f32 %v750, %v798
    %v815 = vsub.f32 %v751, %v799
    %v816 = vsub.f32 %v752, %v800
    %v817 = vsub.f32 %v753, %v801
    %v818 = vsub.f32 %v754, %v802
    %v819 = vsub.f32 %v755, %v803
    %v820 = vsub.f32 %v756, %v804
    %v821 = vsub.f32 %v757, %v805
    %v822 = vsub.f32 %v758, %v806
    %v823 = vsub.f32 %v759, %v807
    %v824 = vsub.f32 %v760, %v808
    %v825 = vsub.f32 %v761, %v809
    %v826 = vsub.f32 %v762, %v810
    %v827 = vmul.f32 %v811, %v746
    %v828 = vmul.f32 %v812, %v746
    %v829 = vmul.f32 %v813, %v746
    %v830 = vmul.f32 %v814, %v746
    %v831 = vmul.f32 %v815, %v746
    %v832 = vmul.f32 %v816, %v746
    %v833 = vmul.f32 %v817, %v746
    %v834 = vmul.f32 %v818, %v746
    %v835 = vmul.f32 %v819, %v746
    %v836 = vmul.f32 %v820, %v746
    %v837 = vmul.f32 %v821, %v746
    %v838 = vmul.f32 %v822, %v746
    %v839 = vmul.f32 %v823, %v746
    %v840 = vmul.f32 %v824, %v746
    %v841 = vmul.f32 %v825, %v746
    %v842 = vmul.f32 %v826, %v746
    %v843 = vmul.f32 %v827, %v827
    %v844 = vmul.f32 %v828, %v828
    %v845 = vmul.f32 %v829, %v829
    %v846 = vmul.f32 %v830, %v830
    %v847 = vmul.f32 %v831, %v831
    %v848 = vmul.f32 %v832, %v832
    %v849 = vmul.f32 %v833, %v833
    %v850 = vmul.f32 %v834, %v834
    %v851 = vmul.f32 %v835, %v835
    %v852 = vmul.f32 %v836, %v836
    %v853 = vmul.f32 %v837, %v837
    %v854 = vmul.f32 %v838, %v838
    %v855 = vmul.f32 %v839, %v839
    %v856 = vmul.f32 %v840, %v840
    %v857 = vmul.f32 %v841, %v841
    %v858 = vmul.f32 %v842, %v842
    %859 = vadd.xlane.f32.xlu0 %v843
    %v860 = vpop.xlane.xlu0 %859
    %861 = vadd.xlane.f32.xlu0 %v844
    %v862 = vpop.xlane.xlu0 %861
    %863 = vadd.xlane.f32.xlu0 %v845
    %v864 = vpop.xlane.xlu0 %863
    %865 = vadd.xlane.f32.xlu0 %v846
    %v866 = vpop.xlane.xlu0 %865
    %867 = vadd.xlane.f32.xlu0 %v847
    %v868 = vpop.xlane.xlu0 %867
    %869 = vadd.xlane.f32.xlu0 %v848
    %v870 = vpop.xlane.xlu0 %869
    %871 = vadd.xlane.f32.xlu0 %v849
    %v872 = vpop.xlane.xlu0 %871
    %873 = vadd.xlane.f32.xlu0 %v850
    %v874 = vpop.xlane.xlu0 %873
    %875 = vadd.xlane.f32.xlu0 %v851
    %v876 = vpop.xlane.xlu0 %875
    %877 = vadd.xlane.f32.xlu0 %v852
    %v878 = vpop.xlane.xlu0 %877
    %879 = vadd.xlane.f32.xlu0 %v853
    %v880 = vpop.xlane.xlu0 %879
    %881 = vadd.xlane.f32.xlu0 %v854
    %v882 = vpop.xlane.xlu0 %881
    %883 = vadd.xlane.f32.xlu0 %v855
    %v884 = vpop.xlane.xlu0 %883
    %885 = vadd.xlane.f32.xlu0 %v856
    %v886 = vpop.xlane.xlu0 %885
    %887 = vadd.xlane.f32.xlu0 %v857
    %v888 = vpop.xlane.xlu0 %887
    %889 = vadd.xlane.f32.xlu0 %v858
    %v890 = vpop.xlane.xlu0 %889
    %v891 = vmul.f32 %v860, 0.03125
    %v892 = vmul.f32 %v862, 0.03125
    %v893 = vmul.f32 %v864, 0.03125
    %v894 = vmul.f32 %v866, 0.03125
    %v895 = vmul.f32 %v868, 0.03125
    %v896 = vmul.f32 %v870, 0.03125
    %v897 = vmul.f32 %v872, 0.03125
    %v898 = vmul.f32 %v874, 0.03125
    %v899 = vmul.f32 %v876, 0.03125
    %v900 = vmul.f32 %v878, 0.03125
    %v901 = vmul.f32 %v880, 0.03125
    %v902 = vmul.f32 %v882, 0.03125
    %v903 = vmul.f32 %v884, 0.03125
    %v904 = vmul.f32 %v886, 0.03125
    %v905 = vmul.f32 %v888, 0.03125
    %v906 = vmul.f32 %v890, 0.03125
    %v907 = vadd.f32 %v891, 1e-05
    %v908 = vadd.f32 %v892, 1e-05
    %v909 = vadd.f32 %v893, 1e-05
    %v910 = vadd.f32 %v894, 1e-05
    %v911 = vadd.f32 %v895, 1e-05
    %v912 = vadd.f32 %v896, 1e-05
    %v913 = vadd.f32 %v897, 1e-05
    %v914 = vadd.f32 %v898, 1e-05
    %v915 = vadd.f32 %v899, 1e-05
    %v916 = vadd.f32 %v900, 1e-05
    %v917 = vadd.f32 %v901, 1e-05
    %v918 = vadd.f32 %v902, 1e-05
    %v919 = vadd.f32 %v903, 1e-05
    %v920 = vadd.f32 %v904, 1e-05
    %v921 = vadd.f32 %v905, 1e-05
    %v922 = vadd.f32 %v906, 1e-05
    %v923 = vrsqrt.pop %v907
    %v924 = vrsqrt.pop %v908
    %v925 = vrsqrt.pop %v909
    %v926 = vrsqrt.pop %v910
    %v927 = vrsqrt.pop %v911
    %v928 = vrsqrt.pop %v912
    %v929 = vrsqrt.pop %v913
    %v930 = vrsqrt.pop %v914
    %v931 = vrsqrt.pop %v915
    %v932 = vrsqrt.pop %v916
    %v933 = vrsqrt.pop %v917
    %v934 = vrsqrt.pop %v918
    %v935 = vrsqrt.pop %v919
    %v936 = vrsqrt.pop %v920
    %v937 = vrsqrt.pop %v921
    %v938 = vrsqrt.pop %v922
    %v939 = vmul.f32 %v827, %v923
    %v940 = vmul.f32 %v828, %v924
    %v941 = vmul.f32 %v829, %v925
    %v942 = vmul.f32 %v830, %v926
    %v943 = vmul.f32 %v831, %v927
    %v944 = vmul.f32 %v832, %v928
    %v945 = vmul.f32 %v833, %v929
    %v946 = vmul.f32 %v834, %v930
    %v947 = vmul.f32 %v835, %v931
    %v948 = vmul.f32 %v836, %v932
    %v949 = vmul.f32 %v837, %v933
    %v950 = vmul.f32 %v838, %v934
    %v951 = vmul.f32 %v839, %v935
    %v952 = vmul.f32 %v840, %v936
    %v953 = vmul.f32 %v841, %v937
    %v954 = vmul.f32 %v842, %v938
    %v955 = vlaneseq
    %v956 = vshrl.u32 %v955, 7
    %v957 = vsub.s32 1, %v956
    %v958 = vrot.slane %v593, %v957
    %v959 = vmul.f32 %v939, %v958
    %v960 = vmul.f32 %v940, %v958
    %v961 = vmul.f32 %v941, %v958
    %v962 = vmul.f32 %v942, %v958
    %v963 = vmul.f32 %v943, %v958
    %v964 = vmul.f32 %v944, %v958
    %v965 = vmul.f32 %v945, %v958
    %v966 = vmul.f32 %v946, %v958
    %v967 = vmul.f32 %v947, %v958
    %v968 = vmul.f32 %v948, %v958
    %v969 = vmul.f32 %v949, %v958
    %v970 = vmul.f32 %v950, %v958
    %v971 = vmul.f32 %v951, %v958
    %v972 = vmul.f32 %v952, %v958
    %v973 = vmul.f32 %v953, %v958
    %v974 = vmul.f32 %v954, %v958
    %v975 = vlaneseq
    %v976 = vshrl.u32 %v975, 7
    %v977 = vsub.s32 2, %v976
    %v978 = vrot.slane %v593, %v977
    %v979 = vadd.f32 %v959, %v978
    %v980 = vadd.f32 %v960, %v978
    %v981 = vadd.f32 %v961, %v978
    %v982 = vadd.f32 %v962, %v978
    %v983 = vadd.f32 %v963, %v978
    %v984 = vadd.f32 %v964, %v978
    %v985 = vadd.f32 %v965, %v978
    %v986 = vadd.f32 %v966, %v978
    %v987 = vadd.f32 %v967, %v978
    %v988 = vadd.f32 %v968, %v978
    %v989 = vadd.f32 %v969, %v978
    %v990 = vadd.f32 %v970, %v978
    %v991 = vadd.f32 %v971, %v978
    %v992 = vadd.f32 %v972, %v978
    %v993 = vadd.f32 %v973, %v978
    %v994 = vadd.f32 %v974, %v978
    %v995 = vmax.f32 %v979, 0.0
    %v996 = vmax.f32 %v980, 0.0
    %v997 = vmax.f32 %v981, 0.0
    %v998 = vmax.f32 %v982, 0.0
    %v999 = vmax.f32 %v983, 0.0
    %v1000 = vmax.f32 %v984, 0.0
    %v1001 = vmax.f32 %v985, 0.0
    %v1002 = vmax.f32 %v986, 0.0
    %v1003 = vmax.f32 %v987, 0.0
    %v1004 = vmax.f32 %v988, 0.0
    %v1005 = vmax.f32 %v989, 0.0
    %v1006 = vmax.f32 %v990, 0.0
    %v1007 = vmax.f32 %v991, 0.0
    %v1008 = vmax.f32 %v992, 0.0
    %v1009 = vmax.f32 %v993, 0.0
    %v1010 = vmax.f32 %v994, 0.0
    %v1011 = vmul.f32 %v995, %v746
    %v1012 = vmul.f32 %v996, %v746
    %v1013 = vmul.f32 %v997, %v746
    %v1014 = vmul.f32 %v998, %v746
    %v1015 = vmul.f32 %v999, %v746
    %v1016 = vmul.f32 %v1000, %v746
    %v1017 = vmul.f32 %v1001, %v746
    %v1018 = vmul.f32 %v1002, %v746
    %v1019 = vmul.f32 %v1003, %v746
    %v1020 = vmul.f32 %v1004, %v746
    %v1021 = vmul.f32 %v1005, %v746
    %v1022 = vmul.f32 %v1006, %v746
    %v1023 = vmul.f32 %v1007, %v746
    %v1024 = vmul.f32 %v1008, %v746
    %v1025 = vmul.f32 %v1009, %v746
    %v1026 = vmul.f32 %v1010, %v746
    %v1027 = vpack.c.bf16 %v1012, %v1011
    %v1028 = vpack.c.bf16 %v1014, %v1013
    %v1029 = vpack.c.bf16 %v1016, %v1015
    %v1030 = vpack.c.bf16 %v1018, %v1017
    %v1031 = vpack.c.bf16 %v1020, %v1019
    %v1032 = vpack.c.bf16 %v1022, %v1021
    %v1033 = vpack.c.bf16 %v1024, %v1023
    %v1034 = vpack.c.bf16 %v1026, %v1025
    %v1035 = vld [vmem:[#allocation4] sm:$0xf]
    %v1036 = vld [vmem:[#allocation4 + $0x4] sm:$0xf]
    %v1037 = vld [vmem:[#allocation4 + $0x8] sm:$0xf]
    %v1038 = vld [vmem:[#allocation4 + $0xc] sm:$0xf]
    %v1039 = vld [vmem:[#allocation4 + $0x10] sm:$0xf]
    %v1040 = vld [vmem:[#allocation4 + $0x14] sm:$0xf]
    %v1041 = vld [vmem:[#allocation4 + $0x18] sm:$0xf]
    %v1042 = vld [vmem:[#allocation4 + $0x1c] sm:$0xf]
    %v1043 = vld [vmem:[#allocation4 + $0x20] sm:$0xf]
    %v1044 = vld [vmem:[#allocation4 + $0x24] sm:$0xf]
    %v1045 = vld [vmem:[#allocation4 + $0x28] sm:$0xf]
    %v1046 = vld [vmem:[#allocation4 + $0x2c] sm:$0xf]
    %v1047 = vld [vmem:[#allocation4 + $0x30] sm:$0xf]
    %v1048 = vld [vmem:[#allocation4 + $0x34] sm:$0xf]
    %v1049 = vld [vmem:[#allocation4 + $0x38] sm:$0xf]
    %v1050 = vld [vmem:[#allocation4 + $0x3c] sm:$0xf]
    %v1051 = vld [vmem:[%s6] sm:$0x1]
    %v1053 = vlaneseq
    %v1054 = vshrl.u32 %v1053, 7
    %v1055 = vsub.s32 0, %v1054
    %v1056 = vrot.slane %v1051, %v1055
    %v1074 = vunpack.c.l.b16 %v1035
    %v1075 = vunpack.c.l.b16 %v1036
    %v1076 = vunpack.c.l.b16 %v1037
    %v1077 = vunpack.c.l.b16 %v1038
    %v1078 = vunpack.c.l.b16 %v1039
    %v1079 = vunpack.c.l.b16 %v1040
    %v1080 = vunpack.c.l.b16 %v1041
    %v1081 = vunpack.c.l.b16 %v1042
    %v1082 = vunpack.c.l.b16 %v1043
    %v1083 = vunpack.c.l.b16 %v1044
    %v1084 = vunpack.c.l.b16 %v1045
    %v1085 = vunpack.c.l.b16 %v1046
    %v1086 = vunpack.c.l.b16 %v1047
    %v1087 = vunpack.c.l.b16 %v1048
    %v1088 = vunpack.c.l.b16 %v1049
    %v1089 = vunpack.c.l.b16 %v1050
    %v1090 = vpack.c.b16 %v1075, %v1074
    %v1091 = vpack.c.b16 %v1077, %v1076
    %v1092 = vpack.c.b16 %v1079, %v1078
    %v1093 = vpack.c.b16 %v1081, %v1080
    %v1094 = vpack.c.b16 %v1083, %v1082
    %v1095 = vpack.c.b16 %v1085, %v1084
    %v1096 = vpack.c.b16 %v1087, %v1086
    %v1097 = vpack.c.b16 %v1089, %v1088
    %1106 = vmatprep.subr.bf16.mxu0 0
    %1107 = vmatpush1.bf16.msra.mxu0 %v1090
    %1108 = vmatprep.subr.bf16.mxu0 0
    %1109 = vmatpush1.bf16.msra.mxu0 %v1091
    %1110 = vmatprep.subr.bf16.mxu0 0
    %1111 = vmatpush1.bf16.msra.mxu0 %v1092
    %1112 = vmatprep.subr.bf16.mxu0 0
    %1113 = vmatpush1.bf16.msra.mxu0 %v1093
    %1114 = vmatprep.subr.bf16.mxu0 0
    %1115 = vmatpush1.bf16.msra.mxu0 %v1094
    %1116 = vmatprep.subr.bf16.mxu0 0
    %1117 = vmatpush1.bf16.msra.mxu0 %v1095
    %1118 = vmatprep.subr.bf16.mxu0 0
    %1119 = vmatpush1.bf16.msra.mxu0 %v1096
    %1120 = vmatprep.subr.bf16.mxu0 0
    %1121 = vmatpush1.bf16.msra.mxu0 %v1097
    %1122 = vmatprep.subr.bf16.mxu0 0
    %1123 = vmatpush1.bf16.msra.mxu0 0
    %1124 = vmatprep.subr.bf16.mxu0 0
    %1125 = vmatpush1.bf16.msra.mxu0 0
    %1126 = vmatprep.subr.bf16.mxu0 0
    %1127 = vmatpush1.bf16.msra.mxu0 0
    %1128 = vmatprep.subr.bf16.mxu0 0
    %1129 = vmatpush1.bf16.msra.mxu0 0
    %1130 = vmatprep.subr.bf16.mxu0 0
    %1131 = vmatpush1.bf16.msra.mxu0 0
    %1132 = vmatprep.subr.bf16.mxu0 0
    %1133 = vmatpush1.bf16.msra.mxu0 0
    %1134 = vmatprep.subr.bf16.mxu0 0
    %1135 = vmatpush1.bf16.msra.mxu0 0
    %1136 = vmatprep.subr.bf16.mxu0 0
    %1137 = vmatpush1.bf16.msra.mxu0 0
    %1138 = vmatprep.mubr.bf16.mxu0 0
    %1139 = vmatmul.mubr.bf16.gmra.mrb[0].mxu0 %v1027
    %v1140 = vpop.f32.mrb[0].mxu0
    %v1141 = vadd.f32 %v1056, %v1140
    %v1142 = vpop.f32.mrb[0].mxu0
    %v1143 = vpop.f32.mrb[0].mxu0
    %v1144 = vadd.f32 %v1056, %v1143
    %v1145 = vpop.f32.mrb[0].mxu0
    %1146 = vmatprep.mubr.bf16.mxu0 0
    %1147 = vmatmul.mubr.bf16.gmra.mrb[0].mxu0 %v1028
    %v1148 = vpop.f32.mrb[0].mxu0
    %v1149 = vadd.f32 %v1056, %v1148
    %v1150 = vpop.f32.mrb[0].mxu0
    %v1151 = vpop.f32.mrb[0].mxu0
    %v1152 = vadd.f32 %v1056, %v1151
    %v1153 = vpop.f32.mrb[0].mxu0
    %1154 = vmatprep.mubr.bf16.mxu0 0
    %1155 = vmatmul.mubr.bf16.gmra.mrb[0].mxu0 %v1029
    %v1156 = vpop.f32.mrb[0].mxu0
    %v1157 = vadd.f32 %v1056, %v1156
    %v1158 = vpop.f32.mrb[0].mxu0
    %v1159 = vpop.f32.mrb[0].mxu0
    %v1160 = vadd.f32 %v1056, %v1159
    %v1161 = vpop.f32.mrb[0].mxu0
    %1162 = vmatprep.mubr.bf16.mxu0 0
    %1163 = vmatmul.mubr.bf16.gmra.mrb[0].mxu0 %v1030
    %v1164 = vpop.f32.mrb[0].mxu0
    %v1165 = vadd.f32 %v1056, %v1164
    %v1166 = vpop.f32.mrb[0].mxu0
    %v1167 = vpop.f32.mrb[0].mxu0
    %v1168 = vadd.f32 %v1056, %v1167
    %v1169 = vpop.f32.mrb[0].mxu0
    %1170 = vmatprep.mubr.bf16.mxu0 0
    %1171 = vmatmul.mubr.bf16.gmra.mrb[0].mxu0 %v1031
    %v1172 = vpop.f32.mrb[0].mxu0
    %v1173 = vadd.f32 %v1056, %v1172
    %v1174 = vpop.f32.mrb[0].mxu0
    %v1175 = vpop.f32.mrb[0].mxu0
    %v1176 = vadd.f32 %v1056, %v1175
    %v1177 = vpop.f32.mrb[0].mxu0
    %1178 = vmatprep.mubr.bf16.mxu0 0
    %1179 = vmatmul.mubr.bf16.gmra.mrb[0].mxu0 %v1032
    %v1180 = vpop.f32.mrb[0].mxu0
    %v1181 = vadd.f32 %v1056, %v1180
    %v1182 = vpop.f32.mrb[0].mxu0
    %v1183 = vpop.f32.mrb[0].mxu0
    %v1184 = vadd.f32 %v1056, %v1183
    %v1185 = vpop.f32.mrb[0].mxu0
    %1186 = vmatprep.mubr.bf16.mxu0 0
    %1187 = vmatmul.mubr.bf16.gmra.mrb[0].mxu0 %v1033
    %v1188 = vpop.f32.mrb[0].mxu0
    %v1189 = vadd.f32 %v1056, %v1188
    %v1190 = vpop.f32.mrb[0].mxu0
    %v1191 = vpop.f32.mrb[0].mxu0
    %v1192 = vadd.f32 %v1056, %v1191
    %v1193 = vpop.f32.mrb[0].mxu0
    %1194 = vmatprep.mubr.bf16.mxu0 0
    %1195 = vmatmul.mubr.bf16.gmra.mrb[0].mxu0 %v1034
    %v1196 = vpop.f32.mrb[0].mxu0
    %v1197 = vadd.f32 %v1056, %v1196
    %v1198 = vpop.f32.mrb[0].mxu0
    %v1199 = vpop.f32.mrb[0].mxu0
    %v1200 = vadd.f32 %v1056, %v1199
    %v1201 = vpop.f32.mrb[0].mxu0
    %1202 = vdwg.mxu0
    %1203 = vst [vmem:[%s7] sm:$0xff] %v1141
    %1204 = vst [vmem:[%s7 + $0x8] sm:$0xff] %v1144
    %1205 = vst [vmem:[%s7 + $0x10] sm:$0xff] %v1149
    %1206 = vst [vmem:[%s7 + $0x18] sm:$0xff] %v1152
    %1207 = vst [vmem:[%s7 + $0x20] sm:$0xff] %v1157
    %1208 = vst [vmem:[%s7 + $0x28] sm:$0xff] %v1160
    %1209 = vst [vmem:[%s7 + $0x30] sm:$0xff] %v1165
    %1210 = vst [vmem:[%s7 + $0x38] sm:$0xff] %v1168
    %1211 = vst [vmem:[%s7 + $0x40] sm:$0xff] %v1173
    %1212 = vst [vmem:[%s7 + $0x48] sm:$0xff] %v1176
    %1213 = vst [vmem:[%s7 + $0x50] sm:$0xff] %v1181
    %1214 = vst [vmem:[%s7 + $0x58] sm:$0xff] %v1184
    %1215 = vst [vmem:[%s7 + $0x60] sm:$0xff] %v1189
    %1216 = vst [vmem:[%s7 + $0x68] sm:$0xff] %v1192
    %1217 = vst [vmem:[%s7 + $0x70] sm:$0xff] %v1197
    %1218 = vst [vmem:[%s7 + $0x78] sm:$0xff] %v1200
    // Predicated region
    $region38: #{forward.1} parent=1 // pred_check
      _
    $region39: #{forward.1} parent=1 // pred_check_branch
      %1220 = sbr.rel (0) target = $region41
    $region40: #{forward.1} parent=1 // pred_region
      _
    $region41: #{forward.1} parent=1 // pred_fallthru
      _
    // Predicated region
    $region42: #{forward.1} parent=1 // pred_check
      _
    $region43: #{forward.1} parent=1 // pred_check_branch
      %1222 = sbr.rel (0) target = $region45
    $region44: #{forward.1} parent=1 // pred_region
      _
    $region45: #{forward.1} parent=1 // pred_fallthru
      _
    %1223 = vsyncpa [#allocation3], 1
    %1224 = vsyncpa [#allocation5], 1

</llo_original>
